<compile_context>
chip_gen: v7x
topology: tpu7x:2x2x1
jax: 0.10.0
libtpu: 0.0.40
codegen_flags: <defaults>
</compile_context>

<pallas_src>
import functools

import jax
import jax.numpy as jnp
from jax.experimental import pallas as pl
from jax.experimental.pallas import tpu as pltpu

KL_FACTOR = 0.00025


def vae_kernel(
    x_ref, eps_ref,
    w1_ref, b1_ref, whead_ref, bhead_ref,
    w2_ref, b2_ref, w3_ref, b3_ref,
    z_ref, mulv_ref, stats_ref,
    *, kl_factor, latent_dim,
):
    x = x_ref[...]                                   # (B, D) f32
    L = latent_dim

    # ---- encoder ----
    # w1 is bf16 in HBM/VMEM; cast the activation to bf16 at the dot only
    # (native MXU bf16 path, f32 accumulate, all elementwise math stays f32).
    h = jnp.dot(x.astype(jnp.bfloat16), w1_ref[...],
                preferred_element_type=jnp.float32) + b1_ref[...]
    h = jnp.maximum(h, 0.0)

    # fused mu / raw heads: one (H, 2L) matmul instead of two (H, L) matmuls.
    head = jnp.dot(h, whead_ref[...],
                   preferred_element_type=jnp.float32) + bhead_ref[...]
    mu = head[:, :L]
    raw = head[:, L:]

    # encoder returns (mu, std) with std = exp(0.5*raw); the VAE then takes
    # log_var = log(std^2) == raw -> skip the exp/log round-trip entirely.
    std = jnp.exp(0.5 * raw)
    var = std * std                                  # == exp(log_var)
    log_var = raw

    # ---- reparameterization ----
    # TODO(synk): epsilon could be drawn in-kernel via pltpu.prng_seed /
    # prng_random_bits; it is passed in deterministically for validation.
    z_lat = mu + std * eps_ref[...]

    # ---- decoder ----
    h2 = jnp.dot(z_lat, w2_ref[...],
                 preferred_element_type=jnp.float32) + b2_ref[...]
    h2 = jnp.maximum(h2, 0.0)
    z = jnp.dot(h2.astype(jnp.bfloat16), w3_ref[...],
                preferred_element_type=jnp.float32) + b3_ref[...]

    z_ref[...] = z
    mulv_ref[...] = head                             # packed [mu | log_var]

    # ---- loss ----
    B = x.shape[0]
    D = x.shape[1]
    # rec_loss = F.mse_loss(z, x)  (mean over all elements)
    sq = (z - x) * (z - x)
    rec = jnp.sum(jnp.sum(sq, axis=1, keepdims=True), axis=0, keepdims=True) / (B * D)
    # kl = mean_b( -0.5 * sum_dim1(1 + log_var - mu^2 - exp(log_var)) )
    kl_per = -0.5 * jnp.sum(1.0 + log_var - mu * mu - var, axis=1, keepdims=True)
    kl = jnp.sum(kl_per, axis=0, keepdims=True) / B                # (1, 1)
    loss = rec + kl * kl_factor

    stats_ref[...] = jnp.concatenate([loss, rec, kl], axis=1)      # (1, 3)


def vae_forward(x_nchw, eps, params, kl_factor=KL_FACTOR):
    B = x_nchw.shape[0]
    D = x_nchw.shape[1] * x_nchw.shape[2] * x_nchw.shape[3]
    H = params["w1"].shape[1]
    L = params["wmu"].shape[1]
    x = x_nchw.reshape(B, D).astype(jnp.float32)

    # fuse the two encoder heads into a single (H, 2L) weight / (1, 2L) bias.
    whead = jnp.concatenate([params["wmu"], params["wlv"]], axis=1)
    bhead = jnp.concatenate([params["bmu"], params["blv"]], axis=1)
    w1 = params["w1"].astype(jnp.bfloat16)   # big weights travel as bf16
    w3 = params["w3"].astype(jnp.bfloat16)

    vmem = pl.BlockSpec(memory_space=pltpu.MemorySpace.VMEM)
    kernel = functools.partial(vae_kernel, kl_factor=kl_factor, latent_dim=L)

    out_shapes = (
        jax.ShapeDtypeStruct((B, D), jnp.float32),      # z (reconstruction)
        jax.ShapeDtypeStruct((B, 2 * L), jnp.float32),  # [mu | log_var]
        jax.ShapeDtypeStruct((1, 3), jnp.float32),      # [loss, rec, kl]
    )

    flops = 2 * B * (D * H + H * 2 * L + L * H + H * D)
    bytes_accessed = (
        x.size * 4 + eps.size * 4
        + w1.size * 2 + w3.size * 2
        + whead.size * 4 + params["w2"].size * 4
        + (params["b1"].size + bhead.size + params["b2"].size
           + params["b3"].size) * 4
        + B * D * 4 + B * 2 * L * 4 + 3 * 4
    )
    cost = pl.CostEstimate(flops=flops, transcendentals=B * L,
                           bytes_accessed=bytes_accessed)

    z, mulv, stats = pl.pallas_call(
        kernel,
        out_shape=out_shapes,
        in_specs=[vmem] * 10,
        out_specs=[vmem] * 3,
        cost_estimate=cost,
    )(
        x, eps,
        w1, params["b1"], whead, bhead,
        params["w2"], params["b2"], w3, params["b3"],
    )
    mu = mulv[:, :L]
    log_var = mulv[:, L:]
    loss, rec, kl = stats[0, 0], stats[0, 1], stats[0, 2]
    z_img = z.reshape(x_nchw.shape)
    return z_img, loss, (rec, kl), mu, log_var


def make_params(key, D, H, L):
    ks = jax.random.split(key, 6)

    def lin(k, fan_in, fan_out, dtype=jnp.float32):
        scale = 1.0 / jnp.sqrt(jnp.float32(fan_in))
        return (jax.random.normal(k, (fan_in, fan_out), jnp.float32) * scale).astype(dtype)

    return {
        # large matmul weights are stored as bf16 (kernel is weight-DMA bound)
        "w1":  lin(ks[0], D, H, jnp.bfloat16), "b1":  jnp.zeros((1, H), jnp.float32),
        "wmu": lin(ks[1], H, L), "bmu": jnp.zeros((1, L), jnp.float32),
        "wlv": lin(ks[2], H, L), "blv": jnp.zeros((1, L), jnp.float32),
        "w2":  lin(ks[3], L, H), "b2":  jnp.zeros((1, H), jnp.float32),
        "w3":  lin(ks[4], H, D, jnp.bfloat16), "b3":  jnp.zeros((1, D), jnp.float32),
    }


def vae_ref(x_nchw, eps, params, kl_factor=KL_FACTOR):
    """Pure-JAX reference of the same forward pass (for validation)."""
    B = x_nchw.shape[0]
    x = x_nchw.reshape(B, -1).astype(jnp.float32)
    h = jnp.maximum(
        jnp.dot(x.astype(jnp.bfloat16), params["w1"],
                preferred_element_type=jnp.float32) + params["b1"], 0.0)
    mu = h @ params["wmu"] + params["bmu"]
    raw = h @ params["wlv"] + params["blv"]
    std = jnp.exp(0.5 * raw)
    log_var = jnp.log(std ** 2)          # reference (PyTorch) formulation
    z_lat = mu + std * eps
    h2 = jnp.maximum(z_lat @ params["w2"] + params["b2"], 0.0)
    z = jnp.dot(h2.astype(jnp.bfloat16), params["w3"],
                preferred_element_type=jnp.float32) + params["b3"]
    rec = jnp.mean((z - x) ** 2)
    kl = jnp.mean(-0.5 * jnp.sum(1 + log_var - mu ** 2 - jnp.exp(log_var), axis=1))
    loss = rec + kl * kl_factor
    return z.reshape(x_nchw.shape), loss, (rec, kl), mu, log_var


if __name__ == "__main__":
    B, C, Himg, Wimg = 2, 4, 16, 16
    D = C * Himg * Wimg      # 1024
    H = 128                  # encoder/decoder hidden width
    L = 32                   # latent dim

    key = jax.random.PRNGKey(0)
    kx, keps, kp = jax.random.split(key, 3)
    x = jax.random.normal(kx, (B, C, Himg, Wimg), jnp.float32)
    # torch.randn_like inside reparameterization is sampled here
    # deterministically and passed into the kernel instead of in-kernel RNG.
    eps = jax.random.normal(keps, (B, L), jnp.float32)
    params = make_params(kp, D, H, L)

    z, loss, (rec, kl), mu, log_var = vae_forward(x, eps, params)
    jax.block_until_ready((z, loss, rec, kl, mu, log_var))

    # cross-check against pure-JAX reference (same bf16 weights / cast points)
    z_r, loss_r, (rec_r, kl_r), mu_r, lv_r = vae_ref(x, eps, params)
    assert jnp.allclose(z, z_r, atol=2e-3, rtol=2e-3)
    assert jnp.allclose(mu, mu_r, atol=2e-3, rtol=2e-3)
    assert jnp.allclose(log_var, lv_r, atol=2e-3, rtol=2e-3)
    assert jnp.allclose(loss, loss_r, atol=2e-3, rtol=2e-3)
    assert jnp.allclose(rec, rec_r, atol=2e-3, rtol=2e-3)
    assert jnp.allclose(kl, kl_r, atol=2e-3, rtol=2e-3)

    print("KERNEL_OK")
</pallas_src>

<mosaic_0001>
module attributes {stable_mosaic.version = 11 : i64} {
  func.func @vae_kernel(%arg0: memref<2x1024xf32, #tpu.memory_space<vmem>>, %arg1: memref<2x32xf32, #tpu.memory_space<vmem>>, %arg2: memref<1024x128xbf16, #tpu.memory_space<vmem>>, %arg3: memref<1x128xf32, #tpu.memory_space<vmem>>, %arg4: memref<128x64xf32, #tpu.memory_space<vmem>>, %arg5: memref<1x64xf32, #tpu.memory_space<vmem>>, %arg6: memref<32x128xf32, #tpu.memory_space<vmem>>, %arg7: memref<1x128xf32, #tpu.memory_space<vmem>>, %arg8: memref<128x1024xbf16, #tpu.memory_space<vmem>>, %arg9: memref<1x1024xf32, #tpu.memory_space<vmem>>, %arg10: memref<2x1024xf32, #tpu.memory_space<vmem>>, %arg11: memref<2x64xf32, #tpu.memory_space<vmem>>, %arg12: memref<1x3xf32, #tpu.memory_space<vmem>>) attributes {dimension_semantics = [], scalar_prefetch = 0 : i64, scratch_operands = 0 : i64, tpu.core_type = #tpu.core_type<tc>} {
    %c0 = arith.constant 0 : index
    %c0_0 = arith.constant 0 : index
    %0 = vector.load %arg0[%c0, %c0_0] : memref<2x1024xf32, #tpu.memory_space<vmem>>, vector<2x1024xf32>
    %1 = arith.truncf %0 : vector<2x1024xf32> to vector<2x1024xbf16>
    %c0_1 = arith.constant 0 : index
    %c0_2 = arith.constant 0 : index
    %2 = vector.load %arg2[%c0_1, %c0_2] : memref<1024x128xbf16, #tpu.memory_space<vmem>>, vector<1024x128xbf16>
    %cst = arith.constant dense<0.000000e+00> : vector<2x128xf32>
    %3 = tpu.matmul %1, %2, %cst {dimension_numbers = #tpu.dot_dimension_numbers<[1], [0], [0], [1], [0, 0, 1, 1], [], []>} : vector<2x1024xbf16>, vector<1024x128xbf16>, vector<2x128xf32> -> vector<2x128xf32>
    %c0_3 = arith.constant 0 : index
    %c0_4 = arith.constant 0 : index
    %4 = vector.load %arg3[%c0_3, %c0_4] : memref<1x128xf32, #tpu.memory_space<vmem>>, vector<1x128xf32>
    %5 = vector.broadcast %4 : vector<1x128xf32> to vector<2x128xf32>
    %6 = arith.addf %3, %5 : vector<2x128xf32>
    %cst_5 = arith.constant 0.000000e+00 : f32
    %7 = vector.broadcast %cst_5 : f32 to vector<2x128xf32>
    %8 = arith.maximumf %6, %7 : vector<2x128xf32>
    %c0_6 = arith.constant 0 : index
    %c0_7 = arith.constant 0 : index
    %9 = vector.load %arg4[%c0_6, %c0_7] : memref<128x64xf32, #tpu.memory_space<vmem>>, vector<128x64xf32>
    %cst_8 = arith.constant dense<0.000000e+00> : vector<2x64xf32>
    %10 = tpu.matmul %8, %9, %cst_8 {dimension_numbers = #tpu.dot_dimension_numbers<[1], [0], [0], [1], [0, 0, 1, 1], [], []>} : vector<2x128xf32>, vector<128x64xf32>, vector<2x64xf32> -> vector<2x64xf32>
    %c0_9 = arith.constant 0 : index
    %c0_10 = arith.constant 0 : index
    %11 = vector.load %arg5[%c0_9, %c0_10] : memref<1x64xf32, #tpu.memory_space<vmem>>, vector<1x64xf32>
    %12 = vector.broadcast %11 : vector<1x64xf32> to vector<2x64xf32>
    %13 = arith.addf %10, %12 : vector<2x64xf32>
    %14 = vector.extract_strided_slice %13 {offsets = [0, 0], sizes = [2, 32], strides = [1, 1]} : vector<2x64xf32> to vector<2x32xf32>
    %15 = vector.extract_strided_slice %13 {offsets = [0, 32], sizes = [2, 32], strides = [1, 1]} : vector<2x64xf32> to vector<2x32xf32>
    %cst_11 = arith.constant 5.000000e-01 : f32
    %16 = vector.broadcast %cst_11 : f32 to vector<2x32xf32>
    %17 = arith.mulf %16, %15 : vector<2x32xf32>
    %18 = math.exp %17 : vector<2x32xf32>
    %19 = arith.mulf %18, %18 : vector<2x32xf32>
    %c0_12 = arith.constant 0 : index
    %c0_13 = arith.constant 0 : index
    %20 = vector.load %arg1[%c0_12, %c0_13] : memref<2x32xf32, #tpu.memory_space<vmem>>, vector<2x32xf32>
    %21 = arith.mulf %18, %20 : vector<2x32xf32>
    %22 = arith.addf %14, %21 : vector<2x32xf32>
    %c0_14 = arith.constant 0 : index
    %c0_15 = arith.constant 0 : index
    %23 = vector.load %arg6[%c0_14, %c0_15] : memref<32x128xf32, #tpu.memory_space<vmem>>, vector<32x128xf32>
    %cst_16 = arith.constant dense<0.000000e+00> : vector<2x128xf32>
    %24 = tpu.matmul %22, %23, %cst_16 {dimension_numbers = #tpu.dot_dimension_numbers<[1], [0], [0], [1], [0, 0, 1, 1], [], []>} : vector<2x32xf32>, vector<32x128xf32>, vector<2x128xf32> -> vector<2x128xf32>
    %c0_17 = arith.constant 0 : index
    %c0_18 = arith.constant 0 : index
    %25 = vector.load %arg7[%c0_17, %c0_18] : memref<1x128xf32, #tpu.memory_space<vmem>>, vector<1x128xf32>
    %26 = vector.broadcast %25 : vector<1x128xf32> to vector<2x128xf32>
    %27 = arith.addf %24, %26 : vector<2x128xf32>
    %cst_19 = arith.constant 0.000000e+00 : f32
    %28 = vector.broadcast %cst_19 : f32 to vector<2x128xf32>
    %29 = arith.maximumf %27, %28 : vector<2x128xf32>
    %30 = arith.truncf %29 : vector<2x128xf32> to vector<2x128xbf16>
    %c0_20 = arith.constant 0 : index
    %c0_21 = arith.constant 0 : index
    %31 = vector.load %arg8[%c0_20, %c0_21] : memref<128x1024xbf16, #tpu.memory_space<vmem>>, vector<128x1024xbf16>
    %cst_22 = arith.constant dense<0.000000e+00> : vector<2x1024xf32>
    %32 = tpu.matmul %30, %31, %cst_22 {dimension_numbers = #tpu.dot_dimension_numbers<[1], [0], [0], [1], [0, 0, 1, 1], [], []>} : vector<2x128xbf16>, vector<128x1024xbf16>, vector<2x1024xf32> -> vector<2x1024xf32>
    %c0_23 = arith.constant 0 : index
    %c0_24 = arith.constant 0 : index
    %33 = vector.load %arg9[%c0_23, %c0_24] : memref<1x1024xf32, #tpu.memory_space<vmem>>, vector<1x1024xf32>
    %34 = vector.broadcast %33 : vector<1x1024xf32> to vector<2x1024xf32>
    %35 = arith.addf %32, %34 : vector<2x1024xf32>
    %c0_25 = arith.constant 0 : index
    %c0_26 = arith.constant 0 : index
    %36 = vector.load %arg10[%c0_25, %c0_26] : memref<2x1024xf32, #tpu.memory_space<vmem>>, vector<2x1024xf32>
    tpu.vector_store %arg10[%c0_25, %c0_26], %35 {strides = array<i32>} : memref<2x1024xf32, #tpu.memory_space<vmem>>, vector<2x1024xf32>,
    %c0_27 = arith.constant 0 : index
    %c0_28 = arith.constant 0 : index
    %37 = vector.load %arg11[%c0_27, %c0_28] : memref<2x64xf32, #tpu.memory_space<vmem>>, vector<2x64xf32>
    tpu.vector_store %arg11[%c0_27, %c0_28], %13 {strides = array<i32>} : memref<2x64xf32, #tpu.memory_space<vmem>>, vector<2x64xf32>,
    %38 = arith.subf %35, %0 : vector<2x1024xf32>
    %39 = arith.subf %35, %0 : vector<2x1024xf32>
    %40 = arith.mulf %38, %39 : vector<2x1024xf32>
    %cst_29 = arith.constant dense<0.000000e+00> : vector<2xf32>
    %41 = vector.multi_reduction <add>, %40, %cst_29 [1] : vector<2x1024xf32> to vector<2xf32>
    %42 = vector.shape_cast %41 : vector<2xf32> to vector<2x1xf32>
    %cst_30 = arith.constant dense<0.000000e+00> : vector<1xf32>
    %43 = vector.multi_reduction <add>, %42, %cst_30 [0] : vector<2x1xf32> to vector<1xf32>
    %44 = vector.shape_cast %43 : vector<1xf32> to vector<1x1xf32>
    %cst_31 = arith.constant 2.048000e+03 : f32
    %45 = vector.broadcast %cst_31 : f32 to vector<1x1xf32>
    %46 = arith.divf %44, %45 : vector<1x1xf32>
    %cst_32 = arith.constant 1.000000e+00 : f32
    %47 = vector.broadcast %cst_32 : f32 to vector<2x32xf32>
    %48 = arith.addf %47, %15 : vector<2x32xf32>
    %49 = arith.mulf %14, %14 : vector<2x32xf32>
    %50 = arith.subf %48, %49 : vector<2x32xf32>
    %51 = arith.subf %50, %19 : vector<2x32xf32>
    %cst_33 = arith.constant dense<0.000000e+00> : vector<2xf32>
    %52 = vector.multi_reduction <add>, %51, %cst_33 [1] : vector<2x32xf32> to vector<2xf32>
    %53 = vector.shape_cast %52 : vector<2xf32> to vector<2x1xf32>
    %cst_34 = arith.constant -5.000000e-01 : f32
    %54 = vector.broadcast %cst_34 : f32 to vector<2x1xf32>
    %55 = arith.mulf %54, %53 : vector<2x1xf32>
    %cst_35 = arith.constant dense<0.000000e+00> : vector<1xf32>
    %56 = vector.multi_reduction <add>, %55, %cst_35 [0] : vector<2x1xf32> to vector<1xf32>
    %57 = vector.shape_cast %56 : vector<1xf32> to vector<1x1xf32>
    %cst_36 = arith.constant 2.000000e+00 : f32
    %58 = vector.broadcast %cst_36 : f32 to vector<1x1xf32>
    %59 = arith.divf %57, %58 : vector<1x1xf32>
    %cst_37 = arith.constant 2.500000e-04 : f32
    %60 = vector.broadcast %cst_37 : f32 to vector<1x1xf32>
    %61 = arith.mulf %59, %60 : vector<1x1xf32>
    %62 = arith.addf %46, %61 : vector<1x1xf32>
    %63 = tpu.concatenate %62, %46, %59 in 1 : vector<1x1xf32>, vector<1x1xf32>, vector<1x1xf32> -> vector<1x3xf32>
    %c0_38 = arith.constant 0 : index
    %c0_39 = arith.constant 0 : index
    %64 = vector.load %arg12[%c0_38, %c0_39] : memref<1x3xf32, #tpu.memory_space<vmem>>, vector<1x3xf32>
    tpu.vector_store %arg12[%c0_38, %c0_39], %63 {strides = array<i32>} : memref<1x3xf32, #tpu.memory_space<vmem>>, vector<1x3xf32>,
    return
  }
}

</mosaic_0001>

<llo_original>
// kernel: tpu_custom_call.1
$region0: #{tpu_custom_call.1}
  #allocation0 [shape = 'u32[]', space=smem, size = 0x4, offset = 0x4, fixed_abs, tag = 'smem constant byte address 0x4 - core index']
  #allocation1 [shape = 'u32[144,128]{1,0:T(1,128)}', space=vmem, size = 0x12000, scoped, tag = 'internal scratch']
  %s0 = inlined_call_operand.vmem [shape: f32[2,1024], index: 0, kind: input, shape index: {}]
  %s1 = inlined_call_operand.vmem [shape: f32[2,32], index: 1, kind: input, shape index: {}]
  %s2 = inlined_call_operand.hbm [shape: bf16[1024,128], index: 2, kind: input, shape index: {}]
  %s3 = inlined_call_operand.vmem [shape: f32[1,128], index: 3, kind: input, shape index: {}]
  %s4 = inlined_call_operand.vmem [shape: f32[128,64], index: 4, kind: input, shape index: {}]
  %s5 = inlined_call_operand.vmem [shape: f32[1,64], index: 5, kind: input, shape index: {}]
  %s6 = inlined_call_operand.vmem [shape: f32[32,128], index: 6, kind: input, shape index: {}]
  %s7 = inlined_call_operand.vmem [shape: f32[1,128], index: 7, kind: input, shape index: {}]
  %s8 = inlined_call_operand.hbm [shape: bf16[128,1024], index: 8, kind: input, shape index: {}]
  %s9 = inlined_call_operand.vmem [shape: f32[1,1024], index: 9, kind: input, shape index: {}]
  %s10 = inlined_call_operand.hbm [shape: f32[2,1024], index: 10, kind: output, shape index: {0}]
  %s11 = inlined_call_operand.hbm [shape: f32[2,64], index: 11, kind: output, shape index: {1}]
  %s12 = inlined_call_operand.hbm [shape: f32[1,3], index: 12, kind: output, shape index: {2}]
  %13 = xla_tuple %s10, %s11, %s12
  %s14 = sld [smem:[#allocation0]]
  $region74: #{tpu_custom_call.1} parent=0
    _
  %s16 = ssub.s32 1, %s14
  %s17 = scalar_select 0, %s16, %s14
  $region1: #{tpu_custom_call.1} parent=0
    #allocation2 [shape = 'u8[262144]{0}', space=vmem, size = 0x40000, scoped, tag = 'input window, operand 2, single buffered']
    #allocation3 [shape = 's32[1]{0}', space=sflag, size = 0x4, scoped, tag = 'scoped memory for tpu_custom_call.1']
    #allocation4 [shape = 's32[1]{0}', space=sflag, size = 0x4, scoped, tag = 'scoped memory for tpu_custom_call.1']
    #allocation5 [shape = 'u8[262144]{0}', space=vmem, size = 0x40000, scoped, tag = 'input window, operand 8, single buffered']
    #allocation6 [shape = 's32[1]{0}', space=sflag, size = 0x4, scoped, tag = 'scoped memory for tpu_custom_call.1']
    #allocation7 [shape = 'u8[8192]{0}', space=vmem, size = 0x2000, scoped, tag = 'output window, operand 0, single buffered']
    #allocation8 [shape = 'u8[1024]{0}', space=vmem, size = 0x400, scoped, tag = 'output window, operand 1, single buffered']
    #allocation9 [shape = 's32[1]{0}', space=sflag, size = 0x4, scoped, tag = 'scoped memory for tpu_custom_call.1']
    #allocation10 [shape = 'u8[512]{0}', space=vmem, size = 0x400, scoped, tag = 'output window, operand 2, single buffered']
    %18 = vsyncpa [#allocation3], 0
    %19 = vsyncpa [#allocation6], 0
    %20 = vsyncpa [#allocation4], 0
    %21 = vsyncpa [#allocation9], 0
    // Predicated region
    $region2: #{tpu_custom_call.1} parent=1 // pred_check
      _
    $region3: #{tpu_custom_call.1} parent=1 // pred_check_branch
      %23 = sbr.rel (0) target = $region5
    $region4: #{tpu_custom_call.1} parent=1 // pred_region
      _
    $region5: #{tpu_custom_call.1} parent=1 // pred_fallthru
      _
    // Predicated region
    $region6: #{tpu_custom_call.1} parent=1 // pred_check
      _
    $region7: #{tpu_custom_call.1} parent=1 // pred_check_branch
      %25 = sbr.rel (0) target = $region9
    $region8: #{tpu_custom_call.1} parent=1 // pred_region
      _
    $region9: #{tpu_custom_call.1} parent=1 // pred_fallthru
      _
    // Predicated region
    $region10: #{tpu_custom_call.1} parent=1 // pred_check
      _
    $region11: #{tpu_custom_call.1} parent=1 // pred_check_branch
      %27 = sbr.rel (0) target = $region13
    $region12: #{tpu_custom_call.1} parent=1 // pred_region
      %s29 = ssub.s32 8192, 8192
      %30 = vsyncadd [#allocation3], %s29
      %s31 = sshll.u32 [#allocation2], 4
      %s32 = int_to_ptr.vmem [resolvable:$true] %s31
      %37 = dma.hbm_to_vmem [thread:$0]  %s2, 8192, %s32, [#allocation3], 64, 64, 4
    $region13: #{tpu_custom_call.1} parent=1 // pred_fallthru
      _
    // Predicated region
    $region14: #{tpu_custom_call.1} parent=1 // pred_check
      _
    $region15: #{tpu_custom_call.1} parent=1 // pred_check_branch
      %39 = sbr.rel (0) target = $region17
    $region16: #{tpu_custom_call.1} parent=1 // pred_region
      _
    $region17: #{tpu_custom_call.1} parent=1 // pred_fallthru
      _
    // Predicated region
    $region18: #{tpu_custom_call.1} parent=1 // pred_check
      _
    $region19: #{tpu_custom_call.1} parent=1 // pred_check_branch
      %41 = sbr.rel (0) target = $region21
    $region20: #{tpu_custom_call.1} parent=1 // pred_region
      _
    $region21: #{tpu_custom_call.1} parent=1 // pred_fallthru
      _
    // Predicated region
    $region22: #{tpu_custom_call.1} parent=1 // pred_check
      _
    $region23: #{tpu_custom_call.1} parent=1 // pred_check_branch
      %43 = sbr.rel (0) target = $region25
    $region24: #{tpu_custom_call.1} parent=1 // pred_region
      _
    $region25: #{tpu_custom_call.1} parent=1 // pred_fallthru
      _
    // Predicated region
    $region26: #{tpu_custom_call.1} parent=1 // pred_check
      _
    $region27: #{tpu_custom_call.1} parent=1 // pred_check_branch
      %45 = sbr.rel (0) target = $region29
    $region28: #{tpu_custom_call.1} parent=1 // pred_region
      _
    $region29: #{tpu_custom_call.1} parent=1 // pred_fallthru
      _
    // Predicated region
    $region30: #{tpu_custom_call.1} parent=1 // pred_check
      _
    $region31: #{tpu_custom_call.1} parent=1 // pred_check_branch
      %47 = sbr.rel (0) target = $region33
    $region32: #{tpu_custom_call.1} parent=1 // pred_region
      _
    $region33: #{tpu_custom_call.1} parent=1 // pred_fallthru
      _
    // Predicated region
    $region34: #{tpu_custom_call.1} parent=1 // pred_check
      _
    $region35: #{tpu_custom_call.1} parent=1 // pred_check_branch
      %49 = sbr.rel (0) target = $region37
    $region36: #{tpu_custom_call.1} parent=1 // pred_region
      %s51 = ssub.s32 8192, 8192
      %52 = vsyncadd [#allocation6], %s51
      %s53 = sshll.u32 [#allocation5], 4
      %s54 = int_to_ptr.vmem [resolvable:$true] %s53
      %59 = dma.hbm_to_vmem [thread:$0]  %s8, 8192, %s54, [#allocation6], 512, 512, 32
    $region37: #{tpu_custom_call.1} parent=1 // pred_fallthru
      _
    // Predicated region
    $region38: #{tpu_custom_call.1} parent=1 // pred_check
      _
    $region39: #{tpu_custom_call.1} parent=1 // pred_check_branch
      %61 = sbr.rel (0) target = $region41
    $region40: #{tpu_custom_call.1} parent=1 // pred_region
      _
    $region41: #{tpu_custom_call.1} parent=1 // pred_fallthru
      _
    // Predicated region
    $region42: #{tpu_custom_call.1} parent=1 // pred_check
      _
    $region43: #{tpu_custom_call.1} parent=1 // pred_check_branch
      %63 = sbr.rel (0) target = $region45
    $region44: #{tpu_custom_call.1} parent=1 // pred_region
      %64 = dma.done [#allocation3], 8192
    $region45: #{tpu_custom_call.1} parent=1 // pred_fallthru
      _
    // Predicated region
    $region46: #{tpu_custom_call.1} parent=1 // pred_check
      _
    $region47: #{tpu_custom_call.1} parent=1 // pred_check_branch
      %66 = sbr.rel (0) target = $region49
    $region48: #{tpu_custom_call.1} parent=1 // pred_region
      %67 = dma.done [#allocation6], 8192
    $region49: #{tpu_custom_call.1} parent=1 // pred_fallthru
      _
    %v69 = vld [vmem:[%s0] sm:$0xff]
    %v70 = vld [vmem:[%s0 + $0x8] sm:$0xff]
    %v73 = vcombine.high %v69, %v69
    %v75 = vunpack.c.l.s4 1983009808
    %v76 = vunpack.c.0.s8 %v75
    %v77 = vlaneseq
    %v78 = vshrl.u32 %v77, 7
    %v79 = vsub.s32 %v76, %v78
    %v80 = vrot.slane %v69, %v79
    %v82 = vunpack.c.l.s4 1983009808
    %v83 = vunpack.c.0.s8 %v82
    %v84 = vlaneseq
    %v85 = vshrl.u32 %v84, 7
    %v86 = vsub.s32 %v83, %v85
    %v87 = vrot.slane %v73, %v86
    %v88 = vcombine.high %v80, %v80
    %v89 = vcombine.high %v87, %v87
    %v90 = vcombine.high %v70, %v70
    %v92 = vunpack.c.l.s4 1983009808
    %v93 = vunpack.c.0.s8 %v92
    %v94 = vlaneseq
    %v95 = vshrl.u32 %v94, 7
    %v96 = vsub.s32 %v93, %v95
    %v97 = vrot.slane %v70, %v96
    %v99 = vunpack.c.l.s4 1983009808
    %v100 = vunpack.c.0.s8 %v99
    %v101 = vlaneseq
    %v102 = vshrl.u32 %v101, 7
    %v103 = vsub.s32 %v100, %v102
    %v104 = vrot.slane %v90, %v103
    %v105 = vcombine.high %v97, %v97
    %v106 = vcombine.high %v104, %v104
    %v115 = vpack.c.bf16 %v80, %v80
    %v116 = vpack.c.bf16 %v88, %v88
    %v117 = vpack.c.bf16 %v87, %v87
    %v118 = vpack.c.bf16 %v89, %v89
    %v119 = vpack.c.bf16 %v97, %v97
    %v120 = vpack.c.bf16 %v105, %v105
    %v121 = vpack.c.bf16 %v104, %v104
    %v122 = vpack.c.bf16 %v106, %v106
    %v123 = vld [vmem:[#allocation2] sm:$0xf]
    %v124 = vld [vmem:[#allocation2 + $0x4] sm:$0xf]
    %v125 = vld [vmem:[#allocation2 + $0x8] sm:$0xf]
    %v126 = vld [vmem:[#allocation2 + $0xc] sm:$0xf]
    %v127 = vld [vmem:[#allocation2 + $0x10] sm:$0xf]
    %v128 = vld [vmem:[#allocation2 + $0x14] sm:$0xf]
    %v129 = vld [vmem:[#allocation2 + $0x18] sm:$0xf]
    %v130 = vld [vmem:[#allocation2 + $0x1c] sm:$0xf]
    %v131 = vld [vmem:[#allocation2 + $0x20] sm:$0xf]
    %v132 = vld [vmem:[#allocation2 + $0x24] sm:$0xf]
    %v133 = vld [vmem:[#allocation2 + $0x28] sm:$0xf]
    %v134 = vld [vmem:[#allocation2 + $0x2c] sm:$0xf]
    %v135 = vld [vmem:[#allocation2 + $0x30] sm:$0xf]
    %v136 = vld [vmem:[#allocation2 + $0x34] sm:$0xf]
    %v137 = vld [vmem:[#allocation2 + $0x38] sm:$0xf]
    %v138 = vld [vmem:[#allocation2 + $0x3c] sm:$0xf]
    %v139 = vld [vmem:[#allocation2 + $0x40] sm:$0xf]
    %v140 = vld [vmem:[#allocation2 + $0x44] sm:$0xf]
    %v141 = vld [vmem:[#allocation2 + $0x48] sm:$0xf]
    %v142 = vld [vmem:[#allocation2 + $0x4c] sm:$0xf]
    %v143 = vld [vmem:[#allocation2 + $0x50] sm:$0xf]
    %v144 = vld [vmem:[#allocation2 + $0x54] sm:$0xf]
    %v145 = vld [vmem:[#allocation2 + $0x58] sm:$0xf]
    %v146 = vld [vmem:[#allocation2 + $0x5c] sm:$0xf]
    %v147 = vld [vmem:[#allocation2 + $0x60] sm:$0xf]
    %v148 = vld [vmem:[#allocation2 + $0x64] sm:$0xf]
    %v149 = vld [vmem:[#allocation2 + $0x68] sm:$0xf]
    %v150 = vld [vmem:[#allocation2 + $0x6c] sm:$0xf]
    %v151 = vld [vmem:[#allocation2 + $0x70] sm:$0xf]
    %v152 = vld [vmem:[#allocation2 + $0x74] sm:$0xf]
    %v153 = vld [vmem:[#allocation2 + $0x78] sm:$0xf]
    %v154 = vld [vmem:[#allocation2 + $0x7c] sm:$0xf]
    %v155 = vld [vmem:[#allocation2 + $0x80] sm:$0xf]
    %v156 = vld [vmem:[#allocation2 + $0x84] sm:$0xf]
    %v157 = vld [vmem:[#allocation2 + $0x88] sm:$0xf]
    %v158 = vld [vmem:[#allocation2 + $0x8c] sm:$0xf]
    %v159 = vld [vmem:[#allocation2 + $0x90] sm:$0xf]
    %v160 = vld [vmem:[#allocation2 + $0x94] sm:$0xf]
    %v161 = vld [vmem:[#allocation2 + $0x98] sm:$0xf]
    %v162 = vld [vmem:[#allocation2 + $0x9c] sm:$0xf]
    %v163 = vld [vmem:[#allocation2 + $0xa0] sm:$0xf]
    %v164 = vld [vmem:[#allocation2 + $0xa4] sm:$0xf]
    %v165 = vld [vmem:[#allocation2 + $0xa8] sm:$0xf]
    %v166 = vld [vmem:[#allocation2 + $0xac] sm:$0xf]
    %v167 = vld [vmem:[#allocation2 + $0xb0] sm:$0xf]
    %v168 = vld [vmem:[#allocation2 + $0xb4] sm:$0xf]
    %v169 = vld [vmem:[#allocation2 + $0xb8] sm:$0xf]
    %v170 = vld [vmem:[#allocation2 + $0xbc] sm:$0xf]
    %v171 = vld [vmem:[#allocation2 + $0xc0] sm:$0xf]
    %v172 = vld [vmem:[#allocation2 + $0xc4] sm:$0xf]
    %v173 = vld [vmem:[#allocation2 + $0xc8] sm:$0xf]
    %v174 = vld [vmem:[#allocation2 + $0xcc] sm:$0xf]
    %v175 = vld [vmem:[#allocation2 + $0xd0] sm:$0xf]
    %v176 = vld [vmem:[#allocation2 + $0xd4] sm:$0xf]
    %v177 = vld [vmem:[#allocation2 + $0xd8] sm:$0xf]
    %v178 = vld [vmem:[#allocation2 + $0xdc] sm:$0xf]
    %v179 = vld [vmem:[#allocation2 + $0xe0] sm:$0xf]
    %v180 = vld [vmem:[#allocation2 + $0xe4] sm:$0xf]
    %v181 = vld [vmem:[#allocation2 + $0xe8] sm:$0xf]
    %v182 = vld [vmem:[#allocation2 + $0xec] sm:$0xf]
    %v183 = vld [vmem:[#allocation2 + $0xf0] sm:$0xf]
    %v184 = vld [vmem:[#allocation2 + $0xf4] sm:$0xf]
    %v185 = vld [vmem:[#allocation2 + $0xf8] sm:$0xf]
    %v186 = vld [vmem:[#allocation2 + $0xfc] sm:$0xf]
    %v187 = vld [vmem:[#allocation2 + $0x100] sm:$0xf]
    %v188 = vld [vmem:[#allocation2 + $0x104] sm:$0xf]
    %v189 = vld [vmem:[#allocation2 + $0x108] sm:$0xf]
    %v190 = vld [vmem:[#allocation2 + $0x10c] sm:$0xf]
    %v191 = vld [vmem:[#allocation2 + $0x110] sm:$0xf]
    %v192 = vld [vmem:[#allocation2 + $0x114] sm:$0xf]
    %v193 = vld [vmem:[#allocation2 + $0x118] sm:$0xf]
    %v194 = vld [vmem:[#allocation2 + $0x11c] sm:$0xf]
    %v195 = vld [vmem:[#allocation2 + $0x120] sm:$0xf]
    %v196 = vld [vmem:[#allocation2 + $0x124] sm:$0xf]
    %v197 = vld [vmem:[#allocation2 + $0x128] sm:$0xf]
    %v198 = vld [vmem:[#allocation2 + $0x12c] sm:$0xf]
    %v199 = vld [vmem:[#allocation2 + $0x130] sm:$0xf]
    %v200 = vld [vmem:[#allocation2 + $0x134] sm:$0xf]
    %v201 = vld [vmem:[#allocation2 + $0x138] sm:$0xf]
    %v202 = vld [vmem:[#allocation2 + $0x13c] sm:$0xf]
    %v203 = vld [vmem:[#allocation2 + $0x140] sm:$0xf]
    %v204 = vld [vmem:[#allocation2 + $0x144] sm:$0xf]
    %v205 = vld [vmem:[#allocation2 + $0x148] sm:$0xf]
    %v206 = vld [vmem:[#allocation2 + $0x14c] sm:$0xf]
    %v207 = vld [vmem:[#allocation2 + $0x150] sm:$0xf]
    %v208 = vld [vmem:[#allocation2 + $0x154] sm:$0xf]
    %v209 = vld [vmem:[#allocation2 + $0x158] sm:$0xf]
    %v210 = vld [vmem:[#allocation2 + $0x15c] sm:$0xf]
    %v211 = vld [vmem:[#allocation2 + $0x160] sm:$0xf]
    %v212 = vld [vmem:[#allocation2 + $0x164] sm:$0xf]
    %v213 = vld [vmem:[#allocation2 + $0x168] sm:$0xf]
    %v214 = vld [vmem:[#allocation2 + $0x16c] sm:$0xf]
    %v215 = vld [vmem:[#allocation2 + $0x170] sm:$0xf]
    %v216 = vld [vmem:[#allocation2 + $0x174] sm:$0xf]
    %v217 = vld [vmem:[#allocation2 + $0x178] sm:$0xf]
    %v218 = vld [vmem:[#allocation2 + $0x17c] sm:$0xf]
    %v219 = vld [vmem:[#allocation2 + $0x180] sm:$0xf]
    %v220 = vld [vmem:[#allocation2 + $0x184] sm:$0xf]
    %v221 = vld [vmem:[#allocation2 + $0x188] sm:$0xf]
    %v222 = vld [vmem:[#allocation2 + $0x18c] sm:$0xf]
    %v223 = vld [vmem:[#allocation2 + $0x190] sm:$0xf]
    %v224 = vld [vmem:[#allocation2 + $0x194] sm:$0xf]
    %v225 = vld [vmem:[#allocation2 + $0x198] sm:$0xf]
    %v226 = vld [vmem:[#allocation2 + $0x19c] sm:$0xf]
    %v227 = vld [vmem:[#allocation2 + $0x1a0] sm:$0xf]
    %v228 = vld [vmem:[#allocation2 + $0x1a4] sm:$0xf]
    %v229 = vld [vmem:[#allocation2 + $0x1a8] sm:$0xf]
    %v230 = vld [vmem:[#allocation2 + $0x1ac] sm:$0xf]
    %v231 = vld [vmem:[#allocation2 + $0x1b0] sm:$0xf]
    %v232 = vld [vmem:[#allocation2 + $0x1b4] sm:$0xf]
    %v233 = vld [vmem:[#allocation2 + $0x1b8] sm:$0xf]
    %v234 = vld [vmem:[#allocation2 + $0x1bc] sm:$0xf]
    %v235 = vld [vmem:[#allocation2 + $0x1c0] sm:$0xf]
    %v236 = vld [vmem:[#allocation2 + $0x1c4] sm:$0xf]
    %v237 = vld [vmem:[#allocation2 + $0x1c8] sm:$0xf]
    %v238 = vld [vmem:[#allocation2 + $0x1cc] sm:$0xf]
    %v239 = vld [vmem:[#allocation2 + $0x1d0] sm:$0xf]
    %v240 = vld [vmem:[#allocation2 + $0x1d4] sm:$0xf]
    %v241 = vld [vmem:[#allocation2 + $0x1d8] sm:$0xf]
    %v242 = vld [vmem:[#allocation2 + $0x1dc] sm:$0xf]
    %v243 = vld [vmem:[#allocation2 + $0x1e0] sm:$0xf]
    %v244 = vld [vmem:[#allocation2 + $0x1e4] sm:$0xf]
    %v245 = vld [vmem:[#allocation2 + $0x1e8] sm:$0xf]
    %v246 = vld [vmem:[#allocation2 + $0x1ec] sm:$0xf]
    %v247 = vld [vmem:[#allocation2 + $0x1f0] sm:$0xf]
    %v248 = vld [vmem:[#allocation2 + $0x1f4] sm:$0xf]
    %v249 = vld [vmem:[#allocation2 + $0x1f8] sm:$0xf]
    %v250 = vld [vmem:[#allocation2 + $0x1fc] sm:$0xf]
    %v251 = vld [vmem:[%s3] sm:$0x1]
    %v253 = vlaneseq
    %v254 = vshrl.u32 %v253, 7
    %v255 = vsub.s32 0, %v254
    %v256 = vrot.slane %v251, %v255
    %v386 = vunpack.c.l.b16 %v123
    %v387 = vunpack.c.l.b16 %v124
    %v388 = vunpack.c.l.b16 %v125
    %v389 = vunpack.c.l.b16 %v126
    %v390 = vunpack.c.l.b16 %v127
    %v391 = vunpack.c.l.b16 %v128
    %v392 = vunpack.c.l.b16 %v129
    %v393 = vunpack.c.l.b16 %v130
    %v394 = vunpack.c.l.b16 %v131
    %v395 = vunpack.c.l.b16 %v132
    %v396 = vunpack.c.l.b16 %v133
    %v397 = vunpack.c.l.b16 %v134
    %v398 = vunpack.c.l.b16 %v135
    %v399 = vunpack.c.l.b16 %v136
    %v400 = vunpack.c.l.b16 %v137
    %v401 = vunpack.c.l.b16 %v138
    %v402 = vunpack.c.l.b16 %v139
    %v403 = vunpack.c.l.b16 %v140
    %v404 = vunpack.c.l.b16 %v141
    %v405 = vunpack.c.l.b16 %v142
    %v406 = vunpack.c.l.b16 %v143
    %v407 = vunpack.c.l.b16 %v144
    %v408 = vunpack.c.l.b16 %v145
    %v409 = vunpack.c.l.b16 %v146
    %v410 = vunpack.c.l.b16 %v147
    %v411 = vunpack.c.l.b16 %v148
    %v412 = vunpack.c.l.b16 %v149
    %v413 = vunpack.c.l.b16 %v150
    %v414 = vunpack.c.l.b16 %v151
    %v415 = vunpack.c.l.b16 %v152
    %v416 = vunpack.c.l.b16 %v153
    %v417 = vunpack.c.l.b16 %v154
    %v418 = vunpack.c.l.b16 %v155
    %v419 = vunpack.c.l.b16 %v156
    %v420 = vunpack.c.l.b16 %v157
    %v421 = vunpack.c.l.b16 %v158
    %v422 = vunpack.c.l.b16 %v159
    %v423 = vunpack.c.l.b16 %v160
    %v424 = vunpack.c.l.b16 %v161
    %v425 = vunpack.c.l.b16 %v162
    %v426 = vunpack.c.l.b16 %v163
    %v427 = vunpack.c.l.b16 %v164
    %v428 = vunpack.c.l.b16 %v165
    %v429 = vunpack.c.l.b16 %v166
    %v430 = vunpack.c.l.b16 %v167
    %v431 = vunpack.c.l.b16 %v168
    %v432 = vunpack.c.l.b16 %v169
    %v433 = vunpack.c.l.b16 %v170
    %v434 = vunpack.c.l.b16 %v171
    %v435 = vunpack.c.l.b16 %v172
    %v436 = vunpack.c.l.b16 %v173
    %v437 = vunpack.c.l.b16 %v174
    %v438 = vunpack.c.l.b16 %v175
    %v439 = vunpack.c.l.b16 %v176
    %v440 = vunpack.c.l.b16 %v177
    %v441 = vunpack.c.l.b16 %v178
    %v442 = vunpack.c.l.b16 %v179
    %v443 = vunpack.c.l.b16 %v180
    %v444 = vunpack.c.l.b16 %v181
    %v445 = vunpack.c.l.b16 %v182
    %v446 = vunpack.c.l.b16 %v183
    %v447 = vunpack.c.l.b16 %v184
    %v448 = vunpack.c.l.b16 %v185
    %v449 = vunpack.c.l.b16 %v186
    %v450 = vunpack.c.l.b16 %v187
    %v451 = vunpack.c.l.b16 %v188
    %v452 = vunpack.c.l.b16 %v189
    %v453 = vunpack.c.l.b16 %v190
    %v454 = vunpack.c.l.b16 %v191
    %v455 = vunpack.c.l.b16 %v192
    %v456 = vunpack.c.l.b16 %v193
    %v457 = vunpack.c.l.b16 %v194
    %v458 = vunpack.c.l.b16 %v195
    %v459 = vunpack.c.l.b16 %v196
    %v460 = vunpack.c.l.b16 %v197
    %v461 = vunpack.c.l.b16 %v198
    %v462 = vunpack.c.l.b16 %v199
    %v463 = vunpack.c.l.b16 %v200
    %v464 = vunpack.c.l.b16 %v201
    %v465 = vunpack.c.l.b16 %v202
    %v466 = vunpack.c.l.b16 %v203
    %v467 = vunpack.c.l.b16 %v204
    %v468 = vunpack.c.l.b16 %v205
    %v469 = vunpack.c.l.b16 %v206
    %v470 = vunpack.c.l.b16 %v207
    %v471 = vunpack.c.l.b16 %v208
    %v472 = vunpack.c.l.b16 %v209
    %v473 = vunpack.c.l.b16 %v210
    %v474 = vunpack.c.l.b16 %v211
    %v475 = vunpack.c.l.b16 %v212
    %v476 = vunpack.c.l.b16 %v213
    %v477 = vunpack.c.l.b16 %v214
    %v478 = vunpack.c.l.b16 %v215
    %v479 = vunpack.c.l.b16 %v216
    %v480 = vunpack.c.l.b16 %v217
    %v481 = vunpack.c.l.b16 %v218
    %v482 = vunpack.c.l.b16 %v219
    %v483 = vunpack.c.l.b16 %v220
    %v484 = vunpack.c.l.b16 %v221
    %v485 = vunpack.c.l.b16 %v222
    %v486 = vunpack.c.l.b16 %v223
    %v487 = vunpack.c.l.b16 %v224
    %v488 = vunpack.c.l.b16 %v225
    %v489 = vunpack.c.l.b16 %v226
    %v490 = vunpack.c.l.b16 %v227
    %v491 = vunpack.c.l.b16 %v228
    %v492 = vunpack.c.l.b16 %v229
    %v493 = vunpack.c.l.b16 %v230
    %v494 = vunpack.c.l.b16 %v231
    %v495 = vunpack.c.l.b16 %v232
    %v496 = vunpack.c.l.b16 %v233
    %v497 = vunpack.c.l.b16 %v234
    %v498 = vunpack.c.l.b16 %v235
    %v499 = vunpack.c.l.b16 %v236
    %v500 = vunpack.c.l.b16 %v237
    %v501 = vunpack.c.l.b16 %v238
    %v502 = vunpack.c.l.b16 %v239
    %v503 = vunpack.c.l.b16 %v240
    %v504 = vunpack.c.l.b16 %v241
    %v505 = vunpack.c.l.b16 %v242
    %v506 = vunpack.c.l.b16 %v243
    %v507 = vunpack.c.l.b16 %v244
    %v508 = vunpack.c.l.b16 %v245
    %v509 = vunpack.c.l.b16 %v246
    %v510 = vunpack.c.l.b16 %v247
    %v511 = vunpack.c.l.b16 %v248
    %v512 = vunpack.c.l.b16 %v249
    %v513 = vunpack.c.l.b16 %v250
    %v514 = vpack.c.b16 %v387, %v386
    %v515 = vpack.c.b16 %v389, %v388
    %v516 = vpack.c.b16 %v391, %v390
    %v517 = vpack.c.b16 %v393, %v392
    %v518 = vpack.c.b16 %v395, %v394
    %v519 = vpack.c.b16 %v397, %v396
    %v520 = vpack.c.b16 %v399, %v398
    %v521 = vpack.c.b16 %v401, %v400
    %v522 = vpack.c.b16 %v403, %v402
    %v523 = vpack.c.b16 %v405, %v404
    %v524 = vpack.c.b16 %v407, %v406
    %v525 = vpack.c.b16 %v409, %v408
    %v526 = vpack.c.b16 %v411, %v410
    %v527 = vpack.c.b16 %v413, %v412
    %v528 = vpack.c.b16 %v415, %v414
    %v529 = vpack.c.b16 %v417, %v416
    %v530 = vpack.c.b16 %v419, %v418
    %v531 = vpack.c.b16 %v421, %v420
    %v532 = vpack.c.b16 %v423, %v422
    %v533 = vpack.c.b16 %v425, %v424
    %v534 = vpack.c.b16 %v427, %v426
    %v535 = vpack.c.b16 %v429, %v428
    %v536 = vpack.c.b16 %v431, %v430
    %v537 = vpack.c.b16 %v433, %v432
    %v538 = vpack.c.b16 %v435, %v434
    %v539 = vpack.c.b16 %v437, %v436
    %v540 = vpack.c.b16 %v439, %v438
    %v541 = vpack.c.b16 %v441, %v440
    %v542 = vpack.c.b16 %v443, %v442
    %v543 = vpack.c.b16 %v445, %v444
    %v544 = vpack.c.b16 %v447, %v446
    %v545 = vpack.c.b16 %v449, %v448
    %v546 = vpack.c.b16 %v451, %v450
    %v547 = vpack.c.b16 %v453, %v452
    %v548 = vpack.c.b16 %v455, %v454
    %v549 = vpack.c.b16 %v457, %v456
    %v550 = vpack.c.b16 %v459, %v458
    %v551 = vpack.c.b16 %v461, %v460
    %v552 = vpack.c.b16 %v463, %v462
    %v553 = vpack.c.b16 %v465, %v464
    %v554 = vpack.c.b16 %v467, %v466
    %v555 = vpack.c.b16 %v469, %v468
    %v556 = vpack.c.b16 %v471, %v470
    %v557 = vpack.c.b16 %v473, %v472
    %v558 = vpack.c.b16 %v475, %v474
    %v559 = vpack.c.b16 %v477, %v476
    %v560 = vpack.c.b16 %v479, %v478
    %v561 = vpack.c.b16 %v481, %v480
    %v562 = vpack.c.b16 %v483, %v482
    %v563 = vpack.c.b16 %v485, %v484
    %v564 = vpack.c.b16 %v487, %v486
    %v565 = vpack.c.b16 %v489, %v488
    %v566 = vpack.c.b16 %v491, %v490
    %v567 = vpack.c.b16 %v493, %v492
    %v568 = vpack.c.b16 %v495, %v494
    %v569 = vpack.c.b16 %v497, %v496
    %v570 = vpack.c.b16 %v499, %v498
    %v571 = vpack.c.b16 %v501, %v500
    %v572 = vpack.c.b16 %v503, %v502
    %v573 = vpack.c.b16 %v505, %v504
    %v574 = vpack.c.b16 %v507, %v506
    %v575 = vpack.c.b16 %v509, %v508
    %v576 = vpack.c.b16 %v511, %v510
    %v577 = vpack.c.b16 %v513, %v512
    %642 = vmatprep.subr.bf16.mxu0 0
    %643 = vmatpush1.bf16.msra.mxu0 %v514
    %644 = vmatprep.subr.bf16.mxu0 0
    %645 = vmatpush1.bf16.msra.mxu0 %v515
    %646 = vmatprep.subr.bf16.mxu0 0
    %647 = vmatpush1.bf16.msra.mxu0 %v516
    %648 = vmatprep.subr.bf16.mxu0 0
    %649 = vmatpush1.bf16.msra.mxu0 %v517
    %650 = vmatprep.subr.bf16.mxu0 0
    %651 = vmatpush1.bf16.msra.mxu0 %v518
    %652 = vmatprep.subr.bf16.mxu0 0
    %653 = vmatpush1.bf16.msra.mxu0 %v519
    %654 = vmatprep.subr.bf16.mxu0 0
    %655 = vmatpush1.bf16.msra.mxu0 %v520
    %656 = vmatprep.subr.bf16.mxu0 0
    %657 = vmatpush1.bf16.msra.mxu0 %v521
    %658 = vmatprep.subr.bf16.mxu0 0
    %659 = vmatpush1.bf16.msra.mxu0 %v522
    %660 = vmatprep.subr.bf16.mxu0 0
    %661 = vmatpush1.bf16.msra.mxu0 %v523
    %662 = vmatprep.subr.bf16.mxu0 0
    %663 = vmatpush1.bf16.msra.mxu0 %v524
    %664 = vmatprep.subr.bf16.mxu0 0
    %665 = vmatpush1.bf16.msra.mxu0 %v525
    %666 = vmatprep.subr.bf16.mxu0 0
    %667 = vmatpush1.bf16.msra.mxu0 %v526
    %668 = vmatprep.subr.bf16.mxu0 0
    %669 = vmatpush1.bf16.msra.mxu0 %v527
    %670 = vmatprep.subr.bf16.mxu0 0
    %671 = vmatpush1.bf16.msra.mxu0 %v528
    %672 = vmatprep.subr.bf16.mxu0 0
    %673 = vmatpush1.bf16.msra.mxu0 %v529
    %674 = vmatprep.mubr.bf16.mxu0 %v116
    %675 = vmatmul.mubr.bf16.gmra.mrb[0].mxu0 %v115
    %v676 = vpop.f32.mrb[0].mxu0
    %v677 = vadd.f32 %v256, %v676
    %v678 = vpop.f32.mrb[0].mxu0
    %v679 = vpop.f32.mrb[0].mxu0
    %v680 = vpop.f32.mrb[0].mxu0
    %681 = vdwg.mxu0
    %682 = vmatprep.subr.bf16.mxu0 0
    %683 = vmatpush1.bf16.msra.mxu0 %v530
    %684 = vmatprep.subr.bf16.mxu0 0
    %685 = vmatpush1.bf16.msra.mxu0 %v531
    %686 = vmatprep.subr.bf16.mxu0 0
    %687 = vmatpush1.bf16.msra.mxu0 %v532
    %688 = vmatprep.subr.bf16.mxu0 0
    %689 = vmatpush1.bf16.msra.mxu0 %v533
    %690 = vmatprep.subr.bf16.mxu0 0
    %691 = vmatpush1.bf16.msra.mxu0 %v534
    %692 = vmatprep.subr.bf16.mxu0 0
    %693 = vmatpush1.bf16.msra.mxu0 %v535
    %694 = vmatprep.subr.bf16.mxu0 0
    %695 = vmatpush1.bf16.msra.mxu0 %v536
    %696 = vmatprep.subr.bf16.mxu0 0
    %697 = vmatpush1.bf16.msra.mxu0 %v537
    %698 = vmatprep.subr.bf16.mxu0 0
    %699 = vmatpush1.bf16.msra.mxu0 %v538
    %700 = vmatprep.subr.bf16.mxu0 0
    %701 = vmatpush1.bf16.msra.mxu0 %v539
    %702 = vmatprep.subr.bf16.mxu0 0
    %703 = vmatpush1.bf16.msra.mxu0 %v540
    %704 = vmatprep.subr.bf16.mxu0 0
    %705 = vmatpush1.bf16.msra.mxu0 %v541
    %706 = vmatprep.subr.bf16.mxu0 0
    %707 = vmatpush1.bf16.msra.mxu0 %v542
    %708 = vmatprep.subr.bf16.mxu0 0
    %709 = vmatpush1.bf16.msra.mxu0 %v543
    %710 = vmatprep.subr.bf16.mxu0 0
    %711 = vmatpush1.bf16.msra.mxu0 %v544
    %712 = vmatprep.subr.bf16.mxu0 0
    %713 = vmatpush1.bf16.msra.mxu0 %v545
    %714 = vmatprep.mubr.bf16.mxu0 %v118
    %715 = vmatmul.mubr.bf16.gmra.mrb[0].mxu0 %v117
    %v716 = vpop.f32.mrb[0].mxu0
    %v717 = vadd.f32 %v677, %v716
    %v718 = vpop.f32.mrb[0].mxu0
    %v719 = vpop.f32.mrb[0].mxu0
    %v720 = vpop.f32.mrb[0].mxu0
    %721 = vdwg.mxu0
    %722 = vmatprep.subr.bf16.mxu0 0
    %723 = vmatpush1.bf16.msra.mxu0 %v546
    %724 = vmatprep.subr.bf16.mxu0 0
    %725 = vmatpush1.bf16.msra.mxu0 %v547
    %726 = vmatprep.subr.bf16.mxu0 0
    %727 = vmatpush1.bf16.msra.mxu0 %v548
    %728 = vmatprep.subr.bf16.mxu0 0
    %729 = vmatpush1.bf16.msra.mxu0 %v549
    %730 = vmatprep.subr.bf16.mxu0 0
    %731 = vmatpush1.bf16.msra.mxu0 %v550
    %732 = vmatprep.subr.bf16.mxu0 0
    %733 = vmatpush1.bf16.msra.mxu0 %v551
    %734 = vmatprep.subr.bf16.mxu0 0
    %735 = vmatpush1.bf16.msra.mxu0 %v552
    %736 = vmatprep.subr.bf16.mxu0 0
    %737 = vmatpush1.bf16.msra.mxu0 %v553
    %738 = vmatprep.subr.bf16.mxu0 0
    %739 = vmatpush1.bf16.msra.mxu0 %v554
    %740 = vmatprep.subr.bf16.mxu0 0
    %741 = vmatpush1.bf16.msra.mxu0 %v555
    %742 = vmatprep.subr.bf16.mxu0 0
    %743 = vmatpush1.bf16.msra.mxu0 %v556
    %744 = vmatprep.subr.bf16.mxu0 0
    %745 = vmatpush1.bf16.msra.mxu0 %v557
    %746 = vmatprep.subr.bf16.mxu0 0
    %747 = vmatpush1.bf16.msra.mxu0 %v558
    %748 = vmatprep.subr.bf16.mxu0 0
    %749 = vmatpush1.bf16.msra.mxu0 %v559
    %750 = vmatprep.subr.bf16.mxu0 0
    %751 = vmatpush1.bf16.msra.mxu0 %v560
    %752 = vmatprep.subr.bf16.mxu0 0
    %753 = vmatpush1.bf16.msra.mxu0 %v561
    %754 = vmatprep.mubr.bf16.mxu0 %v120
    %755 = vmatmul.mubr.bf16.gmra.mrb[0].mxu0 %v119
    %v756 = vpop.f32.mrb[0].mxu0
    %v757 = vadd.f32 %v717, %v756
    %v758 = vpop.f32.mrb[0].mxu0
    %v759 = vpop.f32.mrb[0].mxu0
    %v760 = vpop.f32.mrb[0].mxu0
    %761 = vdwg.mxu0
    %762 = vmatprep.subr.bf16.mxu0 0
    %763 = vmatpush1.bf16.msra.mxu0 %v562
    %764 = vmatprep.subr.bf16.mxu0 0
    %765 = vmatpush1.bf16.msra.mxu0 %v563
    %766 = vmatprep.subr.bf16.mxu0 0
    %767 = vmatpush1.bf16.msra.mxu0 %v564
    %768 = vmatprep.subr.bf16.mxu0 0
    %769 = vmatpush1.bf16.msra.mxu0 %v565
    %770 = vmatprep.subr.bf16.mxu0 0
    %771 = vmatpush1.bf16.msra.mxu0 %v566
    %772 = vmatprep.subr.bf16.mxu0 0
    %773 = vmatpush1.bf16.msra.mxu0 %v567
    %774 = vmatprep.subr.bf16.mxu0 0
    %775 = vmatpush1.bf16.msra.mxu0 %v568
    %776 = vmatprep.subr.bf16.mxu0 0
    %777 = vmatpush1.bf16.msra.mxu0 %v569
    %778 = vmatprep.subr.bf16.mxu0 0
    %779 = vmatpush1.bf16.msra.mxu0 %v570
    %780 = vmatprep.subr.bf16.mxu0 0
    %781 = vmatpush1.bf16.msra.mxu0 %v571
    %782 = vmatprep.subr.bf16.mxu0 0
    %783 = vmatpush1.bf16.msra.mxu0 %v572
    %784 = vmatprep.subr.bf16.mxu0 0
    %785 = vmatpush1.bf16.msra.mxu0 %v573
    %786 = vmatprep.subr.bf16.mxu0 0
    %787 = vmatpush1.bf16.msra.mxu0 %v574
    %788 = vmatprep.subr.bf16.mxu0 0
    %789 = vmatpush1.bf16.msra.mxu0 %v575
    %790 = vmatprep.subr.bf16.mxu0 0
    %791 = vmatpush1.bf16.msra.mxu0 %v576
    %792 = vmatprep.subr.bf16.mxu0 0
    %793 = vmatpush1.bf16.msra.mxu0 %v577
    %794 = vmatprep.mubr.bf16.mxu0 %v122
    %795 = vmatmul.mubr.bf16.gmra.mrb[0].mxu0 %v121
    %v796 = vpop.f32.mrb[0].mxu0
    %v797 = vadd.f32 %v757, %v796
    %v798 = vpop.f32.mrb[0].mxu0
    %v799 = vpop.f32.mrb[0].mxu0
    %v800 = vpop.f32.mrb[0].mxu0
    %801 = vdwg.mxu0
    %v802 = vmax.f32 %v797, 0.0
    %v803 = vld [vmem:[%s4] sm:$0xff]
    %v804 = vld [vmem:[%s4 + $0x8] sm:$0xff]
    %v805 = vld [vmem:[%s4 + $0x10] sm:$0xff]
    %v806 = vld [vmem:[%s4 + $0x18] sm:$0xff]
    %v807 = vld [vmem:[%s4 + $0x20] sm:$0xff]
    %v808 = vld [vmem:[%s4 + $0x28] sm:$0xff]
    %v809 = vld [vmem:[%s4 + $0x30] sm:$0xff]
    %v810 = vld [vmem:[%s4 + $0x38] sm:$0xff]
    %v811 = vld [vmem:[%s4 + $0x40] sm:$0xff]
    %v812 = vld [vmem:[%s4 + $0x48] sm:$0xff]
    %v813 = vld [vmem:[%s4 + $0x50] sm:$0xff]
    %v814 = vld [vmem:[%s4 + $0x58] sm:$0xff]
    %v815 = vld [vmem:[%s4 + $0x60] sm:$0xff]
    %v816 = vld [vmem:[%s4 + $0x68] sm:$0xff]
    %v817 = vld [vmem:[%s4 + $0x70] sm:$0xff]
    %v818 = vld [vmem:[%s4 + $0x78] sm:$0xff]
    %v819 = vld [vmem:[%s5] sm:$0x1]
    %v821 = vlaneseq
    %v822 = vshrl.u32 %v821, 7
    %v823 = vsub.s32 0, %v822
    %v824 = vrot.slane %v819, %v823
    %826 = vmatprep.subr.mxu0 0.0
    %827 = vmatpush1.msra.mxu0 %v803
    %828 = vmatprep.subr.mxu0 0.0
    %829 = vmatpush1.msra.mxu0 %v804
    %830 = vmatprep.subr.mxu0 0.0
    %831 = vmatpush1.msra.mxu0 %v805
    %832 = vmatprep.subr.mxu0 0.0
    %833 = vmatpush1.msra.mxu0 %v806
    %834 = vmatprep.subr.mxu0 0.0
    %835 = vmatpush1.msra.mxu0 %v807
    %836 = vmatprep.subr.mxu0 0.0
    %837 = vmatpush1.msra.mxu0 %v808
    %838 = vmatprep.subr.mxu0 0.0
    %839 = vmatpush1.msra.mxu0 %v809
    %840 = vmatprep.subr.mxu0 0.0
    %841 = vmatpush1.msra.mxu0 %v810
    %842 = vmatprep.subr.mxu0 0.0
    %843 = vmatpush1.msra.mxu0 %v811
    %844 = vmatprep.subr.mxu0 0.0
    %845 = vmatpush1.msra.mxu0 %v812
    %846 = vmatprep.subr.mxu0 0.0
    %847 = vmatpush1.msra.mxu0 %v813
    %848 = vmatprep.subr.mxu0 0.0
    %849 = vmatpush1.msra.mxu0 %v814
    %850 = vmatprep.subr.mxu0 0.0
    %851 = vmatpush1.msra.mxu0 %v815
    %852 = vmatprep.subr.mxu0 0.0
    %853 = vmatpush1.msra.mxu0 %v816
    %854 = vmatprep.subr.mxu0 0.0
    %855 = vmatpush1.msra.mxu0 %v817
    %856 = vmatprep.subr.mxu0 0.0
    %857 = vmatpush1.msra.mxu0 %v818
    %858 = vmatprep.subr.mxu0 0.0
    %859 = vmatpush1.msra.mxu0 0.0
    %860 = vmatprep.subr.mxu0 0.0
    %861 = vmatpush1.msra.mxu0 0.0
    %862 = vmatprep.subr.mxu0 0.0
    %863 = vmatpush1.msra.mxu0 0.0
    %864 = vmatprep.subr.mxu0 0.0
    %865 = vmatpush1.msra.mxu0 0.0
    %866 = vmatprep.subr.mxu0 0.0
    %867 = vmatpush1.msra.mxu0 0.0
    %868 = vmatprep.subr.mxu0 0.0
    %869 = vmatpush1.msra.mxu0 0.0
    %870 = vmatprep.subr.mxu0 0.0
    %871 = vmatpush1.msra.mxu0 0.0
    %872 = vmatprep.subr.mxu0 0.0
    %873 = vmatpush1.msra.mxu0 0.0
    %874 = vmatprep.subr.mxu0 0.0
    %875 = vmatpush1.msra.mxu0 0.0
    %876 = vmatprep.subr.mxu0 0.0
    %877 = vmatpush1.msra.mxu0 0.0
    %878 = vmatprep.subr.mxu0 0.0
    %879 = vmatpush1.msra.mxu0 0.0
    %880 = vmatprep.subr.mxu0 0.0
    %881 = vmatpush1.msra.mxu0 0.0
    %882 = vmatprep.subr.mxu0 0.0
    %883 = vmatpush1.msra.mxu0 0.0
    %884 = vmatprep.subr.mxu0 0.0
    %885 = vmatpush1.msra.mxu0 0.0
    %886 = vmatprep.subr.mxu0 0.0
    %887 = vmatpush1.msra.mxu0 0.0
    %888 = vmatprep.subr.mxu0 0.0
    %889 = vmatpush1.msra.mxu0 0.0
    %890 = vmatprep.mubr.f32.mxu0 0.0
    %891 = vmatmul.mubr.f32.gmra.mrb[0].mxu0 %v802
    %v892 = vpop.f32.mrb[0].mxu0
    %v893 = vadd.f32 %v824, %v892
    %v894 = vpop.f32.mrb[0].mxu0
    %895 = vdwg.mxu0
    %v896 = vmul.f32 %v893, 0.5
    %v897 = vmul.f32 %v896, 1.442695
    %v898 = vpow.pop %v897
    %v899 = vmul.f32 %v898, %v898
    %v900 = vld [vmem:[%s1] sm:$0x3]
    %902 = vrot.lane.b32.xlu0 %v900, 32
    %v903 = vpop.permute.xlu0 %902
    %v905 = vmul.f32 %v898, %v903
    %907 = vrot.lane.b32.xlu0 %v905, 96
    %v908 = vpop.permute.xlu0 %907
    %v910 = vadd.f32 %v893, %v908
    %v911 = vld [vmem:[%s6] sm:$0xff]
    %v912 = vld [vmem:[%s6 + $0x8] sm:$0xff]
    %v913 = vld [vmem:[%s6 + $0x10] sm:$0xff]
    %v914 = vld [vmem:[%s6 + $0x18] sm:$0xff]
    %v915 = vld [vmem:[%s7] sm:$0x1]
    %v917 = vlaneseq
    %v918 = vshrl.u32 %v917, 7
    %v919 = vsub.s32 0, %v918
    %v920 = vrot.slane %v915, %v919
    %vm922 = vcmask 261120
    %v924 = vsel %vm922, %v910, 0
    %926 = vmatprep.subr.mxu0 0.0
    %927 = vmatpush1.msra.mxu0 %v911
    %928 = vmatprep.subr.mxu0 0.0
    %929 = vmatpush1.msra.mxu0 %v912
    %930 = vmatprep.subr.mxu0 0.0
    %931 = vmatpush1.msra.mxu0 %v913
    %932 = vmatprep.subr.mxu0 0.0
    %933 = vmatpush1.msra.mxu0 %v914
    %934 = vmatprep.subr.mxu0 0.0
    %935 = vmatpush1.msra.mxu0 0.0
    %936 = vmatprep.subr.mxu0 0.0
    %937 = vmatpush1.msra.mxu0 0.0
    %938 = vmatprep.subr.mxu0 0.0
    %939 = vmatpush1.msra.mxu0 0.0
    %940 = vmatprep.subr.mxu0 0.0
    %941 = vmatpush1.msra.mxu0 0.0
    %942 = vmatprep.subr.mxu0 0.0
    %943 = vmatpush1.msra.mxu0 0.0
    %944 = vmatprep.subr.mxu0 0.0
    %945 = vmatpush1.msra.mxu0 0.0
    %946 = vmatprep.subr.mxu0 0.0
    %947 = vmatpush1.msra.mxu0 0.0
    %948 = vmatprep.subr.mxu0 0.0
    %949 = vmatpush1.msra.mxu0 0.0
    %950 = vmatprep.subr.mxu0 0.0
    %951 = vmatpush1.msra.mxu0 0.0
    %952 = vmatprep.subr.mxu0 0.0
    %953 = vmatpush1.msra.mxu0 0.0
    %954 = vmatprep.subr.mxu0 0.0
    %955 = vmatpush1.msra.mxu0 0.0
    %956 = vmatprep.subr.mxu0 0.0
    %957 = vmatpush1.msra.mxu0 0.0
    %958 = vmatprep.subr.mxu0 0.0
    %959 = vmatpush1.msra.mxu0 0.0
    %960 = vmatprep.subr.mxu0 0.0
    %961 = vmatpush1.msra.mxu0 0.0
    %962 = vmatprep.subr.mxu0 0.0
    %963 = vmatpush1.msra.mxu0 0.0
    %964 = vmatprep.subr.mxu0 0.0
    %965 = vmatpush1.msra.mxu0 0.0
    %966 = vmatprep.subr.mxu0 0.0
    %967 = vmatpush1.msra.mxu0 0.0
    %968 = vmatprep.subr.mxu0 0.0
    %969 = vmatpush1.msra.mxu0 0.0
    %970 = vmatprep.subr.mxu0 0.0
    %971 = vmatpush1.msra.mxu0 0.0
    %972 = vmatprep.subr.mxu0 0.0
    %973 = vmatpush1.msra.mxu0 0.0
    %974 = vmatprep.subr.mxu0 0.0
    %975 = vmatpush1.msra.mxu0 0.0
    %976 = vmatprep.subr.mxu0 0.0
    %977 = vmatpush1.msra.mxu0 0.0
    %978 = vmatprep.subr.mxu0 0.0
    %979 = vmatpush1.msra.mxu0 0.0
    %980 = vmatprep.subr.mxu0 0.0
    %981 = vmatpush1.msra.mxu0 0.0
    %982 = vmatprep.subr.mxu0 0.0
    %983 = vmatpush1.msra.mxu0 0.0
    %984 = vmatprep.subr.mxu0 0.0
    %985 = vmatpush1.msra.mxu0 0.0
    %986 = vmatprep.subr.mxu0 0.0
    %987 = vmatpush1.msra.mxu0 0.0
    %988 = vmatprep.subr.mxu0 0.0
    %989 = vmatpush1.msra.mxu0 0.0
    %990 = vmatprep.mubr.f32.mxu0 0.0
    %991 = vmatmul.mubr.f32.gmra.mrb[0].mxu0 %v924
    %v992 = vpop.f32.mrb[0].mxu0
    %v993 = vadd.f32 %v920, %v992
    %v994 = vpop.f32.mrb[0].mxu0
    %995 = vdwg.mxu0
    %v996 = vmax.f32 %v993, 0.0
    %v997 = vpack.c.bf16 %v996, %v996
    %v998 = vld [vmem:[#allocation5] sm:$0xff]
    %v999 = vld [vmem:[#allocation5 + $0x8] sm:$0xff]
    %v1000 = vld [vmem:[#allocation5 + $0x10] sm:$0xff]
    %v1001 = vld [vmem:[#allocation5 + $0x18] sm:$0xff]
    %v1002 = vld [vmem:[#allocation5 + $0x20] sm:$0xff]
    %v1003 = vld [vmem:[#allocation5 + $0x28] sm:$0xff]
    %v1004 = vld [vmem:[#allocation5 + $0x30] sm:$0xff]
    %v1005 = vld [vmem:[#allocation5 + $0x38] sm:$0xff]
    %v1006 = vld [vmem:[#allocation5 + $0x40] sm:$0xff]
    %v1007 = vld [vmem:[#allocation5 + $0x48] sm:$0xff]
    %v1008 = vld [vmem:[#allocation5 + $0x50] sm:$0xff]
    %v1009 = vld [vmem:[#allocation5 + $0x58] sm:$0xff]
    %v1010 = vld [vmem:[#allocation5 + $0x60] sm:$0xff]
    %v1011 = vld [vmem:[#allocation5 + $0x68] sm:$0xff]
    %v1012 = vld [vmem:[#allocation5 + $0x70] sm:$0xff]
    %v1013 = vld [vmem:[#allocation5 + $0x78] sm:$0xff]
    %v1014 = vld [vmem:[#allocation5 + $0x80] sm:$0xff]
    %v1015 = vld [vmem:[#allocation5 + $0x88] sm:$0xff]
    %v1016 = vld [vmem:[#allocation5 + $0x90] sm:$0xff]
    %v1017 = vld [vmem:[#allocation5 + $0x98] sm:$0xff]
    %v1018 = vld [vmem:[#allocation5 + $0xa0] sm:$0xff]
    %v1019 = vld [vmem:[#allocation5 + $0xa8] sm:$0xff]
    %v1020 = vld [vmem:[#allocation5 + $0xb0] sm:$0xff]
    %v1021 = vld [vmem:[#allocation5 + $0xb8] sm:$0xff]
    %v1022 = vld [vmem:[#allocation5 + $0xc0] sm:$0xff]
    %v1023 = vld [vmem:[#allocation5 + $0xc8] sm:$0xff]
    %v1024 = vld [vmem:[#allocation5 + $0xd0] sm:$0xff]
    %v1025 = vld [vmem:[#allocation5 + $0xd8] sm:$0xff]
    %v1026 = vld [vmem:[#allocation5 + $0xe0] sm:$0xff]
    %v1027 = vld [vmem:[#allocation5 + $0xe8] sm:$0xff]
    %v1028 = vld [vmem:[#allocation5 + $0xf0] sm:$0xff]
    %v1029 = vld [vmem:[#allocation5 + $0xf8] sm:$0xff]
    %v1030 = vld [vmem:[#allocation5 + $0x100] sm:$0xff]
    %v1031 = vld [vmem:[#allocation5 + $0x108] sm:$0xff]
    %v1032 = vld [vmem:[#allocation5 + $0x110] sm:$0xff]
    %v1033 = vld [vmem:[#allocation5 + $0x118] sm:$0xff]
    %v1034 = vld [vmem:[#allocation5 + $0x120] sm:$0xff]
    %v1035 = vld [vmem:[#allocation5 + $0x128] sm:$0xff]
    %v1036 = vld [vmem:[#allocation5 + $0x130] sm:$0xff]
    %v1037 = vld [vmem:[#allocation5 + $0x138] sm:$0xff]
    %v1038 = vld [vmem:[#allocation5 + $0x140] sm:$0xff]
    %v1039 = vld [vmem:[#allocation5 + $0x148] sm:$0xff]
    %v1040 = vld [vmem:[#allocation5 + $0x150] sm:$0xff]
    %v1041 = vld [vmem:[#allocation5 + $0x158] sm:$0xff]
    %v1042 = vld [vmem:[#allocation5 + $0x160] sm:$0xff]
    %v1043 = vld [vmem:[#allocation5 + $0x168] sm:$0xff]
    %v1044 = vld [vmem:[#allocation5 + $0x170] sm:$0xff]
    %v1045 = vld [vmem:[#allocation5 + $0x178] sm:$0xff]
    %v1046 = vld [vmem:[#allocation5 + $0x180] sm:$0xff]
    %v1047 = vld [vmem:[#allocation5 + $0x188] sm:$0xff]
    %v1048 = vld [vmem:[#allocation5 + $0x190] sm:$0xff]
    %v1049 = vld [vmem:[#allocation5 + $0x198] sm:$0xff]
    %v1050 = vld [vmem:[#allocation5 + $0x1a0] sm:$0xff]
    %v1051 = vld [vmem:[#allocation5 + $0x1a8] sm:$0xff]
    %v1052 = vld [vmem:[#allocation5 + $0x1b0] sm:$0xff]
    %v1053 = vld [vmem:[#allocation5 + $0x1b8] sm:$0xff]
    %v1054 = vld [vmem:[#allocation5 + $0x1c0] sm:$0xff]
    %v1055 = vld [vmem:[#allocation5 + $0x1c8] sm:$0xff]
    %v1056 = vld [vmem:[#allocation5 + $0x1d0] sm:$0xff]
    %v1057 = vld [vmem:[#allocation5 + $0x1d8] sm:$0xff]
    %v1058 = vld [vmem:[#allocation5 + $0x1e0] sm:$0xff]
    %v1059 = vld [vmem:[#allocation5 + $0x1e8] sm:$0xff]
    %v1060 = vld [vmem:[#allocation5 + $0x1f0] sm:$0xff]
    %v1061 = vld [vmem:[#allocation5 + $0x1f8] sm:$0xff]
    %v1062 = vld [vmem:[%s9] sm:$0xff]
    %v1064 = vlaneseq
    %v1065 = vshrl.u32 %v1064, 7
    %v1066 = vsub.s32 0, %v1065
    %v1067 = vrot.slane %v1062, %v1066
    %v1068 = vlaneseq
    %v1069 = vshrl.u32 %v1068, 7
    %v1070 = vsub.s32 1, %v1069
    %v1071 = vrot.slane %v1062, %v1070
    %v1072 = vlaneseq
    %v1073 = vshrl.u32 %v1072, 7
    %v1074 = vsub.s32 2, %v1073
    %v1075 = vrot.slane %v1062, %v1074
    %v1076 = vlaneseq
    %v1077 = vshrl.u32 %v1076, 7
    %v1078 = vsub.s32 3, %v1077
    %v1079 = vrot.slane %v1062, %v1078
    %v1080 = vlaneseq
    %v1081 = vshrl.u32 %v1080, 7
    %v1082 = vsub.s32 4, %v1081
    %v1083 = vrot.slane %v1062, %v1082
    %v1084 = vlaneseq
    %v1085 = vshrl.u32 %v1084, 7
    %v1086 = vsub.s32 5, %v1085
    %v1087 = vrot.slane %v1062, %v1086
    %v1088 = vlaneseq
    %v1089 = vshrl.u32 %v1088, 7
    %v1090 = vsub.s32 6, %v1089
    %v1091 = vrot.slane %v1062, %v1090
    %v1092 = vlaneseq
    %v1093 = vshrl.u32 %v1092, 7
    %v1094 = vsub.s32 7, %v1093
    %v1095 = vrot.slane %v1062, %v1094
    %v1168 = vunpack.c.l.b16 %v998
    %v1169 = vunpack.c.h.b16 %v998
    %v1170 = vunpack.c.l.b16 %v999
    %v1171 = vunpack.c.h.b16 %v999
    %v1172 = vunpack.c.l.b16 %v1000
    %v1173 = vunpack.c.h.b16 %v1000
    %v1174 = vunpack.c.l.b16 %v1001
    %v1175 = vunpack.c.h.b16 %v1001
    %v1176 = vunpack.c.l.b16 %v1002
    %v1177 = vunpack.c.h.b16 %v1002
    %v1178 = vunpack.c.l.b16 %v1003
    %v1179 = vunpack.c.h.b16 %v1003
    %v1180 = vunpack.c.l.b16 %v1004
    %v1181 = vunpack.c.h.b16 %v1004
    %v1182 = vunpack.c.l.b16 %v1005
    %v1183 = vunpack.c.h.b16 %v1005
    %v1184 = vunpack.c.l.b16 %v1006
    %v1185 = vunpack.c.h.b16 %v1006
    %v1186 = vunpack.c.l.b16 %v1007
    %v1187 = vunpack.c.h.b16 %v1007
    %v1188 = vunpack.c.l.b16 %v1008
    %v1189 = vunpack.c.h.b16 %v1008
    %v1190 = vunpack.c.l.b16 %v1009
    %v1191 = vunpack.c.h.b16 %v1009
    %v1192 = vunpack.c.l.b16 %v1010
    %v1193 = vunpack.c.h.b16 %v1010
    %v1194 = vunpack.c.l.b16 %v1011
    %v1195 = vunpack.c.h.b16 %v1011
    %v1196 = vunpack.c.l.b16 %v1012
    %v1197 = vunpack.c.h.b16 %v1012
    %v1198 = vunpack.c.l.b16 %v1013
    %v1199 = vunpack.c.h.b16 %v1013
    %v1200 = vunpack.c.l.b16 %v1014
    %v1201 = vunpack.c.h.b16 %v1014
    %v1202 = vunpack.c.l.b16 %v1015
    %v1203 = vunpack.c.h.b16 %v1015
    %v1204 = vunpack.c.l.b16 %v1016
    %v1205 = vunpack.c.h.b16 %v1016
    %v1206 = vunpack.c.l.b16 %v1017
    %v1207 = vunpack.c.h.b16 %v1017
    %v1208 = vunpack.c.l.b16 %v1018
    %v1209 = vunpack.c.h.b16 %v1018
    %v1210 = vunpack.c.l.b16 %v1019
    %v1211 = vunpack.c.h.b16 %v1019
    %v1212 = vunpack.c.l.b16 %v1020
    %v1213 = vunpack.c.h.b16 %v1020
    %v1214 = vunpack.c.l.b16 %v1021
    %v1215 = vunpack.c.h.b16 %v1021
    %v1216 = vunpack.c.l.b16 %v1022
    %v1217 = vunpack.c.h.b16 %v1022
    %v1218 = vunpack.c.l.b16 %v1023
    %v1219 = vunpack.c.h.b16 %v1023
    %v1220 = vunpack.c.l.b16 %v1024
    %v1221 = vunpack.c.h.b16 %v1024
    %v1222 = vunpack.c.l.b16 %v1025
    %v1223 = vunpack.c.h.b16 %v1025
    %v1224 = vunpack.c.l.b16 %v1026
    %v1225 = vunpack.c.h.b16 %v1026
    %v1226 = vunpack.c.l.b16 %v1027
    %v1227 = vunpack.c.h.b16 %v1027
    %v1228 = vunpack.c.l.b16 %v1028
    %v1229 = vunpack.c.h.b16 %v1028
    %v1230 = vunpack.c.l.b16 %v1029
    %v1231 = vunpack.c.h.b16 %v1029
    %v1232 = vunpack.c.l.b16 %v1030
    %v1233 = vunpack.c.h.b16 %v1030
    %v1234 = vunpack.c.l.b16 %v1031
    %v1235 = vunpack.c.h.b16 %v1031
    %v1236 = vunpack.c.l.b16 %v1032
    %v1237 = vunpack.c.h.b16 %v1032
    %v1238 = vunpack.c.l.b16 %v1033
    %v1239 = vunpack.c.h.b16 %v1033
    %v1240 = vunpack.c.l.b16 %v1034
    %v1241 = vunpack.c.h.b16 %v1034
    %v1242 = vunpack.c.l.b16 %v1035
    %v1243 = vunpack.c.h.b16 %v1035
    %v1244 = vunpack.c.l.b16 %v1036
    %v1245 = vunpack.c.h.b16 %v1036
    %v1246 = vunpack.c.l.b16 %v1037
    %v1247 = vunpack.c.h.b16 %v1037
    %v1248 = vunpack.c.l.b16 %v1038
    %v1249 = vunpack.c.h.b16 %v1038
    %v1250 = vunpack.c.l.b16 %v1039
    %v1251 = vunpack.c.h.b16 %v1039
    %v1252 = vunpack.c.l.b16 %v1040
    %v1253 = vunpack.c.h.b16 %v1040
    %v1254 = vunpack.c.l.b16 %v1041
    %v1255 = vunpack.c.h.b16 %v1041
    %v1256 = vunpack.c.l.b16 %v1042
    %v1257 = vunpack.c.h.b16 %v1042
    %v1258 = vunpack.c.l.b16 %v1043
    %v1259 = vunpack.c.h.b16 %v1043
    %v1260 = vunpack.c.l.b16 %v1044
    %v1261 = vunpack.c.h.b16 %v1044
    %v1262 = vunpack.c.l.b16 %v1045
    %v1263 = vunpack.c.h.b16 %v1045
    %v1264 = vunpack.c.l.b16 %v1046
    %v1265 = vunpack.c.h.b16 %v1046
    %v1266 = vunpack.c.l.b16 %v1047
    %v1267 = vunpack.c.h.b16 %v1047
    %v1268 = vunpack.c.l.b16 %v1048
    %v1269 = vunpack.c.h.b16 %v1048
    %v1270 = vunpack.c.l.b16 %v1049
    %v1271 = vunpack.c.h.b16 %v1049
    %v1272 = vunpack.c.l.b16 %v1050
    %v1273 = vunpack.c.h.b16 %v1050
    %v1274 = vunpack.c.l.b16 %v1051
    %v1275 = vunpack.c.h.b16 %v1051
    %v1276 = vunpack.c.l.b16 %v1052
    %v1277 = vunpack.c.h.b16 %v1052
    %v1278 = vunpack.c.l.b16 %v1053
    %v1279 = vunpack.c.h.b16 %v1053
    %v1280 = vunpack.c.l.b16 %v1054
    %v1281 = vunpack.c.h.b16 %v1054
    %v1282 = vunpack.c.l.b16 %v1055
    %v1283 = vunpack.c.h.b16 %v1055
    %v1284 = vunpack.c.l.b16 %v1056
    %v1285 = vunpack.c.h.b16 %v1056
    %v1286 = vunpack.c.l.b16 %v1057
    %v1287 = vunpack.c.h.b16 %v1057
    %v1288 = vunpack.c.l.b16 %v1058
    %v1289 = vunpack.c.h.b16 %v1058
    %v1290 = vunpack.c.l.b16 %v1059
    %v1291 = vunpack.c.h.b16 %v1059
    %v1292 = vunpack.c.l.b16 %v1060
    %v1293 = vunpack.c.h.b16 %v1060
    %v1294 = vunpack.c.l.b16 %v1061
    %v1295 = vunpack.c.h.b16 %v1061
    %v1296 = vpack.c.b16 %v1176, %v1168
    %v1297 = vpack.c.b16 %v1177, %v1169
    %v1298 = vpack.c.b16 %v1178, %v1170
    %v1299 = vpack.c.b16 %v1179, %v1171
    %v1300 = vpack.c.b16 %v1180, %v1172
    %v1301 = vpack.c.b16 %v1181, %v1173
    %v1302 = vpack.c.b16 %v1182, %v1174
    %v1303 = vpack.c.b16 %v1183, %v1175
    %v1304 = vpack.c.b16 %v1192, %v1184
    %v1305 = vpack.c.b16 %v1193, %v1185
    %v1306 = vpack.c.b16 %v1194, %v1186
    %v1307 = vpack.c.b16 %v1195, %v1187
    %v1308 = vpack.c.b16 %v1196, %v1188
    %v1309 = vpack.c.b16 %v1197, %v1189
    %v1310 = vpack.c.b16 %v1198, %v1190
    %v1311 = vpack.c.b16 %v1199, %v1191
    %v1312 = vpack.c.b16 %v1208, %v1200
    %v1313 = vpack.c.b16 %v1209, %v1201
    %v1314 = vpack.c.b16 %v1210, %v1202
    %v1315 = vpack.c.b16 %v1211, %v1203
    %v1316 = vpack.c.b16 %v1212, %v1204
    %v1317 = vpack.c.b16 %v1213, %v1205
    %v1318 = vpack.c.b16 %v1214, %v1206
    %v1319 = vpack.c.b16 %v1215, %v1207
    %v1320 = vpack.c.b16 %v1224, %v1216
    %v1321 = vpack.c.b16 %v1225, %v1217
    %v1322 = vpack.c.b16 %v1226, %v1218
    %v1323 = vpack.c.b16 %v1227, %v1219
    %v1324 = vpack.c.b16 %v1228, %v1220
    %v1325 = vpack.c.b16 %v1229, %v1221
    %v1326 = vpack.c.b16 %v1230, %v1222
    %v1327 = vpack.c.b16 %v1231, %v1223
    %v1328 = vpack.c.b16 %v1240, %v1232
    %v1329 = vpack.c.b16 %v1241, %v1233
    %v1330 = vpack.c.b16 %v1242, %v1234
    %v1331 = vpack.c.b16 %v1243, %v1235
    %v1332 = vpack.c.b16 %v1244, %v1236
    %v1333 = vpack.c.b16 %v1245, %v1237
    %v1334 = vpack.c.b16 %v1246, %v1238
    %v1335 = vpack.c.b16 %v1247, %v1239
    %v1336 = vpack.c.b16 %v1256, %v1248
    %v1337 = vpack.c.b16 %v1257, %v1249
    %v1338 = vpack.c.b16 %v1258, %v1250
    %v1339 = vpack.c.b16 %v1259, %v1251
    %v1340 = vpack.c.b16 %v1260, %v1252
    %v1341 = vpack.c.b16 %v1261, %v1253
    %v1342 = vpack.c.b16 %v1262, %v1254
    %v1343 = vpack.c.b16 %v1263, %v1255
    %v1344 = vpack.c.b16 %v1272, %v1264
    %v1345 = vpack.c.b16 %v1273, %v1265
    %v1346 = vpack.c.b16 %v1274, %v1266
    %v1347 = vpack.c.b16 %v1275, %v1267
    %v1348 = vpack.c.b16 %v1276, %v1268
    %v1349 = vpack.c.b16 %v1277, %v1269
    %v1350 = vpack.c.b16 %v1278, %v1270
    %v1351 = vpack.c.b16 %v1279, %v1271
    %v1352 = vpack.c.b16 %v1288, %v1280
    %v1353 = vpack.c.b16 %v1289, %v1281
    %v1354 = vpack.c.b16 %v1290, %v1282
    %v1355 = vpack.c.b16 %v1291, %v1283
    %v1356 = vpack.c.b16 %v1292, %v1284
    %v1357 = vpack.c.b16 %v1293, %v1285
    %v1358 = vpack.c.b16 %v1294, %v1286
    %v1359 = vpack.c.b16 %v1295, %v1287
    %1424 = vmatprep.subr.bf16.mxu0 %v1297
    %1425 = vmatpush1.bf16.msra.mxu0 %v1296
    %1426 = vmatprep.subr.bf16.mxu0 %v1305
    %1427 = vmatpush1.bf16.msra.mxu0 %v1304
    %1428 = vmatprep.subr.bf16.mxu0 %v1313
    %1429 = vmatpush1.bf16.msra.mxu0 %v1312
    %1430 = vmatprep.subr.bf16.mxu0 %v1321
    %1431 = vmatpush1.bf16.msra.mxu0 %v1320
    %1432 = vmatprep.subr.bf16.mxu0 %v1329
    %1433 = vmatpush1.bf16.msra.mxu0 %v1328
    %1434 = vmatprep.subr.bf16.mxu0 %v1337
    %1435 = vmatpush1.bf16.msra.mxu0 %v1336
    %1436 = vmatprep.subr.bf16.mxu0 %v1345
    %1437 = vmatpush1.bf16.msra.mxu0 %v1344
    %1438 = vmatprep.subr.bf16.mxu0 %v1353
    %1439 = vmatpush1.bf16.msra.mxu0 %v1352
    %1440 = vmatprep.subr.bf16.mxu0 0
    %1441 = vmatpush1.bf16.msra.mxu0 0
    %1442 = vmatprep.subr.bf16.mxu0 0
    %1443 = vmatpush1.bf16.msra.mxu0 0
    %1444 = vmatprep.subr.bf16.mxu0 0
    %1445 = vmatpush1.bf16.msra.mxu0 0
    %1446 = vmatprep.subr.bf16.mxu0 0
    %1447 = vmatpush1.bf16.msra.mxu0 0
    %1448 = vmatprep.subr.bf16.mxu0 0
    %1449 = vmatpush1.bf16.msra.mxu0 0
    %1450 = vmatprep.subr.bf16.mxu0 0
    %1451 = vmatpush1.bf16.msra.mxu0 0
    %1452 = vmatprep.subr.bf16.mxu0 0
    %1453 = vmatpush1.bf16.msra.mxu0 0
    %1454 = vmatprep.subr.bf16.mxu0 0
    %1455 = vmatpush1.bf16.msra.mxu0 0
    %1456 = vmatprep.mubr.bf16.mxu0 0
    %1457 = vmatmul.mubr.bf16.gmra.mrb[0].mxu0 %v997
    %v1458 = vpop.f32.mrb[0].mxu0
    %v1459 = vadd.f32 %v1067, %v1458
    %v1460 = vpop.f32.mrb[0].mxu0
    %v1461 = vadd.f32 %v1071, %v1460
    %v1462 = vpop.f32.mrb[0].mxu0
    %v1463 = vpop.f32.mrb[0].mxu0
    %1464 = vdwg.mxu0
    %1465 = vmatprep.subr.bf16.mxu0 %v1299
    %1466 = vmatpush1.bf16.msra.mxu0 %v1298
    %1467 = vmatprep.subr.bf16.mxu0 %v1307
    %1468 = vmatpush1.bf16.msra.mxu0 %v1306
    %1469 = vmatprep.subr.bf16.mxu0 %v1315
    %1470 = vmatpush1.bf16.msra.mxu0 %v1314
    %1471 = vmatprep.subr.bf16.mxu0 %v1323
    %1472 = vmatpush1.bf16.msra.mxu0 %v1322
    %1473 = vmatprep.subr.bf16.mxu0 %v1331
    %1474 = vmatpush1.bf16.msra.mxu0 %v1330
    %1475 = vmatprep.subr.bf16.mxu0 %v1339
    %1476 = vmatpush1.bf16.msra.mxu0 %v1338
    %1477 = vmatprep.subr.bf16.mxu0 %v1347
    %1478 = vmatpush1.bf16.msra.mxu0 %v1346
    %1479 = vmatprep.subr.bf16.mxu0 %v1355
    %1480 = vmatpush1.bf16.msra.mxu0 %v1354
    %1481 = vmatprep.subr.bf16.mxu0 0
    %1482 = vmatpush1.bf16.msra.mxu0 0
    %1483 = vmatprep.subr.bf16.mxu0 0
    %1484 = vmatpush1.bf16.msra.mxu0 0
    %1485 = vmatprep.subr.bf16.mxu0 0
    %1486 = vmatpush1.bf16.msra.mxu0 0
    %1487 = vmatprep.subr.bf16.mxu0 0
    %1488 = vmatpush1.bf16.msra.mxu0 0
    %1489 = vmatprep.subr.bf16.mxu0 0
    %1490 = vmatpush1.bf16.msra.mxu0 0
    %1491 = vmatprep.subr.bf16.mxu0 0
    %1492 = vmatpush1.bf16.msra.mxu0 0
    %1493 = vmatprep.subr.bf16.mxu0 0
    %1494 = vmatpush1.bf16.msra.mxu0 0
    %1495 = vmatprep.subr.bf16.mxu0 0
    %1496 = vmatpush1.bf16.msra.mxu0 0
    %1497 = vmatprep.mubr.bf16.mxu0 0
    %1498 = vmatmul.mubr.bf16.gmra.mrb[0].mxu0 %v997
    %v1499 = vpop.f32.mrb[0].mxu0
    %v1500 = vadd.f32 %v1075, %v1499
    %v1501 = vpop.f32.mrb[0].mxu0
    %v1502 = vadd.f32 %v1079, %v1501
    %v1503 = vpop.f32.mrb[0].mxu0
    %v1504 = vpop.f32.mrb[0].mxu0
    %1505 = vdwg.mxu0
    %1506 = vmatprep.subr.bf16.mxu0 %v1301
    %1507 = vmatpush1.bf16.msra.mxu0 %v1300
    %1508 = vmatprep.subr.bf16.mxu0 %v1309
    %1509 = vmatpush1.bf16.msra.mxu0 %v1308
    %1510 = vmatprep.subr.bf16.mxu0 %v1317
    %1511 = vmatpush1.bf16.msra.mxu0 %v1316
    %1512 = vmatprep.subr.bf16.mxu0 %v1325
    %1513 = vmatpush1.bf16.msra.mxu0 %v1324
    %1514 = vmatprep.subr.bf16.mxu0 %v1333
    %1515 = vmatpush1.bf16.msra.mxu0 %v1332
    %1516 = vmatprep.subr.bf16.mxu0 %v1341
    %1517 = vmatpush1.bf16.msra.mxu0 %v1340
    %1518 = vmatprep.subr.bf16.mxu0 %v1349
    %1519 = vmatpush1.bf16.msra.mxu0 %v1348
    %1520 = vmatprep.subr.bf16.mxu0 %v1357
    %1521 = vmatpush1.bf16.msra.mxu0 %v1356
    %1522 = vmatprep.subr.bf16.mxu0 0
    %1523 = vmatpush1.bf16.msra.mxu0 0
    %1524 = vmatprep.subr.bf16.mxu0 0
    %1525 = vmatpush1.bf16.msra.mxu0 0
    %1526 = vmatprep.subr.bf16.mxu0 0
    %1527 = vmatpush1.bf16.msra.mxu0 0
    %1528 = vmatprep.subr.bf16.mxu0 0
    %1529 = vmatpush1.bf16.msra.mxu0 0
    %1530 = vmatprep.subr.bf16.mxu0 0
    %1531 = vmatpush1.bf16.msra.mxu0 0
    %1532 = vmatprep.subr.bf16.mxu0 0
    %1533 = vmatpush1.bf16.msra.mxu0 0
    %1534 = vmatprep.subr.bf16.mxu0 0
    %1535 = vmatpush1.bf16.msra.mxu0 0
    %1536 = vmatprep.subr.bf16.mxu0 0
    %1537 = vmatpush1.bf16.msra.mxu0 0
    %1538 = vmatprep.mubr.bf16.mxu0 0
    %1539 = vmatmul.mubr.bf16.gmra.mrb[0].mxu0 %v997
    %v1540 = vpop.f32.mrb[0].mxu0
    %v1541 = vadd.f32 %v1083, %v1540
    %v1542 = vpop.f32.mrb[0].mxu0
    %v1543 = vadd.f32 %v1087, %v1542
    %v1544 = vpop.f32.mrb[0].mxu0
    %v1545 = vpop.f32.mrb[0].mxu0
    %1546 = vdwg.mxu0
    %1547 = vmatprep.subr.bf16.mxu0 %v1303
    %1548 = vmatpush1.bf16.msra.mxu0 %v1302
    %1549 = vmatprep.subr.bf16.mxu0 %v1311
    %1550 = vmatpush1.bf16.msra.mxu0 %v1310
    %1551 = vmatprep.subr.bf16.mxu0 %v1319
    %1552 = vmatpush1.bf16.msra.mxu0 %v1318
    %1553 = vmatprep.subr.bf16.mxu0 %v1327
    %1554 = vmatpush1.bf16.msra.mxu0 %v1326
    %1555 = vmatprep.subr.bf16.mxu0 %v1335
    %1556 = vmatpush1.bf16.msra.mxu0 %v1334
    %1557 = vmatprep.subr.bf16.mxu0 %v1343
    %1558 = vmatpush1.bf16.msra.mxu0 %v1342
    %1559 = vmatprep.subr.bf16.mxu0 %v1351
    %1560 = vmatpush1.bf16.msra.mxu0 %v1350
    %1561 = vmatprep.subr.bf16.mxu0 %v1359
    %1562 = vmatpush1.bf16.msra.mxu0 %v1358
    %1563 = vmatprep.subr.bf16.mxu0 0
    %1564 = vmatpush1.bf16.msra.mxu0 0
    %1565 = vmatprep.subr.bf16.mxu0 0
    %1566 = vmatpush1.bf16.msra.mxu0 0
    %1567 = vmatprep.subr.bf16.mxu0 0
    %1568 = vmatpush1.bf16.msra.mxu0 0
    %1569 = vmatprep.subr.bf16.mxu0 0
    %1570 = vmatpush1.bf16.msra.mxu0 0
    %1571 = vmatprep.subr.bf16.mxu0 0
    %1572 = vmatpush1.bf16.msra.mxu0 0
    %1573 = vmatprep.subr.bf16.mxu0 0
    %1574 = vmatpush1.bf16.msra.mxu0 0
    %1575 = vmatprep.subr.bf16.mxu0 0
    %1576 = vmatpush1.bf16.msra.mxu0 0
    %1577 = vmatprep.subr.bf16.mxu0 0
    %1578 = vmatpush1.bf16.msra.mxu0 0
    %1579 = vmatprep.mubr.bf16.mxu0 0
    %1580 = vmatmul.mubr.bf16.gmra.mrb[0].mxu0 %v997
    %v1581 = vpop.f32.mrb[0].mxu0
    %v1582 = vadd.f32 %v1091, %v1581
    %v1583 = vpop.f32.mrb[0].mxu0
    %v1584 = vadd.f32 %v1095, %v1583
    %v1585 = vpop.f32.mrb[0].mxu0
    %v1586 = vpop.f32.mrb[0].mxu0
    %1587 = vdwg.mxu0
    %v1596 = vcombine.low %v1459, %v1461
    %v1597 = vcombine.low %v1500, %v1502
    %v1599 = vunpack.c.l.s4 1983009808
    %v1600 = vunpack.c.0.s8 %v1599
    %v1601 = vlaneseq
    %v1602 = vshrl.u32 %v1601, 7
    %v1603 = vsub.s32 %v1600, %v1602
    %v1604 = vrot.slane %v1596, %v1603
    %v1606 = vunpack.c.l.s4 1983009808
    %v1607 = vunpack.c.0.s8 %v1606
    %v1608 = vlaneseq
    %v1609 = vshrl.u32 %v1608, 7
    %v1610 = vsub.s32 %v1607, %v1609
    %v1611 = vrot.slane %v1597, %v1610
    %v1612 = vcombine.low %v1604, %v1611
    %v1613 = vcombine.low %v1541, %v1543
    %v1614 = vcombine.low %v1582, %v1584
    %v1616 = vunpack.c.l.s4 1983009808
    %v1617 = vunpack.c.0.s8 %v1616
    %v1618 = vlaneseq
    %v1619 = vshrl.u32 %v1618, 7
    %v1620 = vsub.s32 %v1617, %v1619
    %v1621 = vrot.slane %v1613, %v1620
    %v1623 = vunpack.c.l.s4 1983009808
    %v1624 = vunpack.c.0.s8 %v1623
    %v1625 = vlaneseq
    %v1626 = vshrl.u32 %v1625, 7
    %v1627 = vsub.s32 %v1624, %v1626
    %v1628 = vrot.slane %v1614, %v1627
    %v1629 = vcombine.low %v1621, %v1628
    %1632 = vst [vmem:[#allocation7] sm:$0xff] %v1612
    %1633 = vst [vmem:[#allocation7 + $0x8] sm:$0xff] %v1629
    %vm1634 = vcmask 517120
    %1635 = vst.msk [vmem:[#allocation8] sm:$0x3] %vm1634, %v893
    %v1636 = vsub.f32 %v1459, %v80
    %v1637 = vsub.f32 %v1461, %v88
    %v1638 = vsub.f32 %v1500, %v87
    %v1639 = vsub.f32 %v1502, %v89
    %v1640 = vsub.f32 %v1541, %v97
    %v1641 = vsub.f32 %v1543, %v105
    %v1642 = vsub.f32 %v1582, %v104
    %v1643 = vsub.f32 %v1584, %v106
    %v1644 = vmul.f32 %v1636, %v1636
    %v1645 = vmul.f32 %v1637, %v1637
    %v1646 = vmul.f32 %v1638, %v1638
    %v1647 = vmul.f32 %v1639, %v1639
    %v1648 = vmul.f32 %v1640, %v1640
    %v1649 = vmul.f32 %v1641, %v1641
    %v1650 = vmul.f32 %v1642, %v1642
    %v1651 = vmul.f32 %v1643, %v1643
    %vm1652 = vcmask 1041408
    %v1653 = vsel %vm1652, %v1644, 0.0
    %v1654 = vsel %vm1652, %v1645, 0.0
    %v1655 = vadd.f32 %v1653, %v1654
    %v1656 = vsel %vm1652, %v1646, 0.0
    %v1657 = vadd.f32 %v1655, %v1656
    %v1658 = vsel %vm1652, %v1647, 0.0
    %v1659 = vadd.f32 %v1657, %v1658
    %v1660 = vsel %vm1652, %v1648, 0.0
    %v1661 = vadd.f32 %v1659, %v1660
    %v1662 = vsel %vm1652, %v1649, 0.0
    %v1663 = vadd.f32 %v1661, %v1662
    %v1664 = vsel %vm1652, %v1650, 0.0
    %v1665 = vadd.f32 %v1663, %v1664
    %v1666 = vsel %vm1652, %v1651, 0.0
    %v1667 = vadd.f32 %v1665, %v1666
    %1668 = vadd.xlane.f32.xlu0 %v1667
    %v1669 = vpop.xlane.xlu0 %1668
    %v1670 = vsel %vm1652, %v1669, 0.0
    %v1671 = vrot.slane %v1670, 4
    %v1672 = vadd.f32 %v1670, %v1671
    %v1673 = vrot.slane %v1672, 2
    %v1674 = vadd.f32 %v1672, %v1673
    %v1675 = vrot.slane %v1674, 1
    %v1676 = vadd.f32 %v1674, %v1675
    %v1677 = vrcp.pop 2048.0
    %v1678 = vmul.f32 %v1676, %v1677
    %v1679 = vadd.f32 %v893, 1.0
    %v1680 = vmul.f32 %v893, %v893
    %1682 = vrot.lane.b32.xlu0 %v1680, 32
    %v1683 = vpop.permute.xlu0 %1682
    %v1685 = vsub.f32 %v1679, %v1683
    %v1686 = vsub.f32 %v1685, %v899
    %1688 = vrot.lane.b32.xlu0 %v1686, 96
    %v1689 = vpop.permute.xlu0 %1688
    %vm1691 = vcmask 254976
    %v1692 = vsel %vm1691, %v1689, 0.0
    %1693 = vadd.xlane.f32.xlu0 %v1692
    %v1694 = vpop.xlane.xlu0 %1693
    %v1695 = vmul.f32 %v1694, -0.5
    %v1696 = vsel %vm1652, %v1695, 0.0
    %v1697 = vrot.slane %v1696, 4
    %v1698 = vadd.f32 %v1696, %v1697
    %v1699 = vrot.slane %v1698, 2
    %v1700 = vadd.f32 %v1698, %v1699
    %v1701 = vrot.slane %v1700, 1
    %v1702 = vadd.f32 %v1700, %v1701
    %v1703 = vrcp.pop 2.0
    %v1704 = vmul.f32 %v1702, %v1703
    %v1705 = vmul.f32 %v1704, 0.00025
    %v1706 = vadd.f32 %v1678, %v1705
    %vm1707 = vcmask 7168
    %v1708 = vsel %vm1707, %v1706, %v1678
    %vm1709 = vcmask 15360
    %v1710 = vsel %vm1709, %v1708, %v1704
    %vm1711 = vcmask 16384
    %1712 = vst.msk [vmem:[#allocation10] sm:$0x1] %vm1711, %v1710
    // Predicated region
    $region50: #{tpu_custom_call.1} parent=1 // pred_check
      _
    $region51: #{tpu_custom_call.1} parent=1 // pred_check_branch
      %1714 = sbr.rel (0) target = $region53
    $region52: #{tpu_custom_call.1} parent=1 // pred_region
      %s1716 = ssub.s32 256, 256
      %1717 = vsyncadd [#allocation4], %s1716
      %s1719 = sshll.u32 [#allocation7], 4
      %s1720 = int_to_ptr.vmem [resolvable:$true] %s1719
      %1722 = dma.vmem_to_hbm [thread:$0]  %s1720, 256, %s10, [#allocation4]
    $region53: #{tpu_custom_call.1} parent=1 // pred_fallthru
      _
    // Predicated region
    $region54: #{tpu_custom_call.1} parent=1 // pred_check
      _
    $region55: #{tpu_custom_call.1} parent=1 // pred_check_branch
      %1724 = sbr.rel (0) target = $region57
    $region56: #{tpu_custom_call.1} parent=1 // pred_region
      %s1726 = ssub.s32 32, 32
      %1727 = vsyncadd [#allocation9], %s1726
      %s1729 = sshll.u32 [#allocation8], 4
      %s1730 = int_to_ptr.vmem [resolvable:$true] %s1729
      %1732 = dma.vmem_to_hbm [thread:$0]  %s1730, 32, %s11, [#allocation9]
    $region57: #{tpu_custom_call.1} parent=1 // pred_fallthru
      _
    // Predicated region
    $region58: #{tpu_custom_call.1} parent=1 // pred_check
      _
    $region59: #{tpu_custom_call.1} parent=1 // pred_check_branch
      %1734 = sbr.rel (0) target = $region61
    $region60: #{tpu_custom_call.1} parent=1 // pred_region
      %s1736 = ssub.s32 16, 16
      %1737 = vsyncadd [#allocation9], %s1736
      %s1739 = sshll.u32 [#allocation10], 4
      %s1740 = int_to_ptr.vmem [resolvable:$true] %s1739
      %1742 = dma.vmem_to_hbm [thread:$0]  %s1740, 16, %s12, [#allocation9]
    $region61: #{tpu_custom_call.1} parent=1 // pred_fallthru
      _
    // Predicated region
    $region62: #{tpu_custom_call.1} parent=1 // pred_check
      _
    $region63: #{tpu_custom_call.1} parent=1 // pred_check_branch
      %1744 = sbr.rel (0) target = $region65
    $region64: #{tpu_custom_call.1} parent=1 // pred_region
      %1745 = dma.done [#allocation4], 256
    $region65: #{tpu_custom_call.1} parent=1 // pred_fallthru
      _
    // Predicated region
    $region66: #{tpu_custom_call.1} parent=1 // pred_check
      _
    $region67: #{tpu_custom_call.1} parent=1 // pred_check_branch
      %1747 = sbr.rel (0) target = $region69
    $region68: #{tpu_custom_call.1} parent=1 // pred_region
      %1748 = dma.done [#allocation9], 32
    $region69: #{tpu_custom_call.1} parent=1 // pred_fallthru
      _
    // Predicated region
    $region70: #{tpu_custom_call.1} parent=1 // pred_check
      _
    $region71: #{tpu_custom_call.1} parent=1 // pred_check_branch
      %1750 = sbr.rel (0) target = $region73
    $region72: #{tpu_custom_call.1} parent=1 // pred_region
      %1751 = dma.done [#allocation9], 16
    $region73: #{tpu_custom_call.1} parent=1 // pred_fallthru
      _
    %1752 = vsyncpa [#allocation3], 1
    %1753 = vsyncpa [#allocation6], 1
    %1754 = vsyncpa [#allocation4], 1
    %1755 = vsyncpa [#allocation9], 1

</llo_original>
